<compile_context>
chip_gen: v7x
topology: tpu7x:2x2x1
jax: 0.10.0
libtpu: 0.0.40
codegen_flags: <defaults>
</compile_context>

<pallas_src>
import functools

import jax
import jax.numpy as jnp
from jax.experimental import pallas as pl
from jax.experimental.pallas import tpu as pltpu


OUT_PAD = 128      # lane-dense classifier output width (padded; sliced after)
HEAD_HIDDEN = 256  # fc_1 output width


def _layer_norm(x, g, b, eps=1e-5):
    # TODO(synk): eps matches nn.LayerNorm default (1e-5); some BERT encoders
    # use 1e-12 -- confirm against the actual `bert` submodule being replaced.
    mu = jnp.mean(x, axis=-1, keepdims=True)
    var = jnp.mean(jnp.square(x - mu), axis=-1, keepdims=True)
    return (x - mu) * jax.lax.rsqrt(var + eps) * g + b


def _pick_batch_block(batch):
    # Output block is (Bb, OUT_PAD); its sublane dim must be a multiple of 8
    # or equal to the full batch dim.  Prefer 8 rows/step (full sublane tile).
    if batch % 8 == 0:
        return 8
    return batch


# ----------------------------------------------------------------------------
# Fused Pallas kernel: encoder layer + classifier head, Bb batch elements/step
# ----------------------------------------------------------------------------
def fused_encoder_head_kernel(
    x_ref, mask_ref,
    wqkv_ref, wo_ref,
    ln1g_ref, ln1b_ref,
    wff1_ref, bff1_ref, wff2_ref, bff2_ref,
    ln2g_ref, ln2b_ref,
    w1_ref, b1_ref, w2_ref, b2_ref,
    out_ref,
    *, n_heads):
    xb16 = x_ref[...]                       # [Bb, S, H] bf16 (streamed)
    x = xb16.astype(jnp.float32)            # f32 residual / LN path
    mask = mask_ref[...]                    # [Bb, 1, S] f32 (1 = attend)
    Bb, S, H = x.shape
    hd = H // n_heads
    scale = 1.0 / float(hd) ** 0.5

    # Hoisted mask bias: one compare/broadcast/select for all heads.
    mask_bias = jnp.where(mask > 0.0, 0.0, -1e9)            # [Bb, 1, S]

    # --- fused QKV projection: one [Bb*S, H] @ [H, 3H] matmul ---
    x2d = xb16.reshape(Bb * S, H)
    qkv = jnp.dot(x2d, wqkv_ref[...],
                  preferred_element_type=jnp.float32)        # [Bb*S, 3H] f32
    q = qkv[:, 0 * H:1 * H].reshape(Bb, S, H).astype(jnp.bfloat16)
    k = qkv[:, 1 * H:2 * H].reshape(Bb, S, H).astype(jnp.bfloat16)
    v = qkv[:, 2 * H:3 * H].reshape(Bb, S, H).astype(jnp.bfloat16)

    # --- multi-head attention; only the bf16 context slab persists across
    #     heads, scores die inside each iteration ---
    # TODO(synk): per-head lane slices are sub-128 wide at small hd; at real
    # head dims lay Q/K/V out head-major / lane-padded instead.
    ctx_parts = []
    for h in range(n_heads):
        lo = h * hd
        qh = q[:, :, lo:lo + hd]                             # [Bb, S, hd]
        kh = k[:, :, lo:lo + hd]
        vh = v[:, :, lo:lo + hd]
        sc = jnp.einsum('bqd,bkd->bqk', qh, kh,
                        preferred_element_type=jnp.float32) * scale
        sc = sc + mask_bias                                  # [Bb, S, S]
        m = jnp.max(sc, axis=-1, keepdims=True)
        p = jnp.exp(sc - m)                                  # unnormalized
        denom = jnp.sum(p, axis=-1, keepdims=True)           # [Bb, S, 1]
        ctx = jnp.einsum('bqk,bkd->bqd', p.astype(jnp.bfloat16), vh,
                         preferred_element_type=jnp.float32)  # [Bb, S, hd]
        # Deferred softmax normalization on the EUP (approx reciprocal).
        ctx = ctx * pl.reciprocal(denom, approx=True)
        ctx_parts.append(ctx.astype(jnp.bfloat16))
    ctx_all = jnp.concatenate(ctx_parts, axis=-1)            # [Bb, S, H] bf16

    # --- single output projection after the head loop ---
    attn = jnp.dot(ctx_all.reshape(Bb * S, H), wo_ref[...],
                   preferred_element_type=jnp.float32).reshape(Bb, S, H)

    x1 = _layer_norm(x + attn, ln1g_ref[...], ln1b_ref[...])  # [Bb, S, H] f32

    # --- feed-forward ---
    h1 = jnp.dot(x1.reshape(Bb * S, H).astype(jnp.bfloat16), wff1_ref[...],
                 preferred_element_type=jnp.float32) + bff1_ref[...]
    h1 = jnp.maximum(h1, 0.0)
    ff = jnp.dot(h1.astype(jnp.bfloat16), wff2_ref[...],
                 preferred_element_type=jnp.float32).reshape(Bb, S, H)
    x2 = _layer_norm(x1 + ff + bff2_ref[...], ln2g_ref[...], ln2b_ref[...])

    # --- classifier head fused on the CLS rows (seq position 0) ---
    cls = x2[:, 0, :]                                        # [Bb, H] f32
    hc = jnp.dot(cls.astype(jnp.bfloat16), w1_ref[...],
                 preferred_element_type=jnp.float32) + b1_ref[...]   # [Bb,256]
    hc = jnp.maximum(hc, 0.0)
    logits = jnp.dot(hc.astype(jnp.bfloat16), w2_ref[...],
                     preferred_element_type=jnp.float32) + b2_ref[...]  # [Bb,128]
    out_ref[...] = logits.astype(out_ref.dtype)              # full (Bb,128) store


def fused_bert_classifier(x_emb, mask, p, hp, n_heads):
    """x_emb: [B,S,H] bf16; mask: [B,1,S] f32. Returns padded logits [B, OUT_PAD]."""
    B, S, H = x_emb.shape
    FFN = p["w_ff1"].shape[1]
    Bb = _pick_batch_block(B)

    kernel = functools.partial(fused_encoder_head_kernel, n_heads=n_heads)

    def resident(arr):  # whole-array block, constant index map -> VMEM-resident
        nd = arr.ndim
        return pl.BlockSpec(arr.shape, lambda g, nd=nd: (0,) * nd)

    weight_args = (p["wqkv"], p["wo"],
                   p["ln1_g"], p["ln1_b"],
                   p["w_ff1"], p["b_ff1"], p["w_ff2"], p["b_ff2"],
                   p["ln2_g"], p["ln2_b"],
                   hp["w1"], hp["b1"], hp["w2"], hp["b2"])

    in_specs = [
        pl.BlockSpec((Bb, S, H), lambda g: (g, 0, 0)),   # bf16 embeddings
        pl.BlockSpec((Bb, 1, S), lambda g: (g, 0, 0)),   # attention mask
    ] + [resident(a) for a in weight_args]

    out_spec = pl.BlockSpec((Bb, OUT_PAD), lambda g: (g, 0))

    flops = B * (2 * S * H * 3 * H                 # fused QKV projection
                 + 4 * S * S * H                   # scores + context (all heads)
                 + 2 * S * H * H                   # output projection
                 + 4 * S * H * FFN                 # FFN up + down
                 + 2 * H * HEAD_HIDDEN + 2 * HEAD_HIDDEN * OUT_PAD)
    transcendentals = B * (n_heads * S * (S + 1) + 2 * S)
    bytes_accessed = (int(x_emb.size) * x_emb.dtype.itemsize
                      + int(mask.size) * 4 + B * OUT_PAD * 4
                      + sum(int(a.size) * a.dtype.itemsize for a in weight_args))

    out = pl.pallas_call(
        kernel,
        grid=(B // Bb,),
        in_specs=in_specs,
        out_specs=out_spec,
        out_shape=jax.ShapeDtypeStruct((B, OUT_PAD), jnp.float32),
        compiler_params=pltpu.CompilerParams(
            dimension_semantics=("parallel",),
            vmem_limit_bytes=48 * 1024 * 1024),
        cost_estimate=pl.CostEstimate(flops=flops,
                                      transcendentals=transcendentals,
                                      bytes_accessed=bytes_accessed),
    )(x_emb, mask, *weight_args)
    return out


# ----------------------------------------------------------------------------
# Parameter construction
# ----------------------------------------------------------------------------
def init_bert_params(key, vocab, max_len, n_seg, hid, ffn):
    # TODO(synk): `bert` is an external submodule in the PyTorch spec (only
    # bert.encode is called); a deterministic single-layer encoder with the
    # same interface is substituted here.
    ks = jax.random.split(key, 9)
    s = 0.02
    f32, bf16 = jnp.float32, jnp.bfloat16
    nrm = lambda k, shape: s * jax.random.normal(k, shape, f32)
    wq = nrm(ks[3], (hid, hid))
    wk = nrm(ks[4], (hid, hid))
    wv = nrm(ks[5], (hid, hid))
    return {
        "tok_emb": nrm(ks[0], (vocab, hid)),
        "pos_emb": nrm(ks[1], (max_len, hid)),
        "seg_emb": nrm(ks[2], (n_seg, hid)),
        "wqkv": jnp.concatenate([wq, wk, wv], axis=1).astype(bf16),  # [H, 3H]
        "wo": nrm(ks[6], (hid, hid)).astype(bf16),
        "w_ff1": nrm(ks[7], (hid, ffn)).astype(bf16),
        "b_ff1": jnp.zeros((1, ffn), f32),
        "w_ff2": nrm(ks[8], (ffn, hid)).astype(bf16),
        "b_ff2": jnp.zeros((1, hid), f32),
        "ln1_g": jnp.ones((1, hid), f32),
        "ln1_b": jnp.zeros((1, hid), f32),
        "ln2_g": jnp.ones((1, hid), f32),
        "ln2_b": jnp.zeros((1, hid), f32),
    }


def init_head_params(key, hid, out_dim):
    assert out_dim <= OUT_PAD, f"out_dim={out_dim} exceeds OUT_PAD={OUT_PAD}"
    k1, k2 = jax.random.split(key)
    f32, bf16 = jnp.float32, jnp.bfloat16
    w1 = 0.02 * jax.random.normal(k1, (hid, HEAD_HIDDEN), f32)
    w2 = 0.02 * jax.random.normal(k2, (HEAD_HIDDEN, out_dim), f32)
    # Pad fc_2 output to 128 lanes (lane-dense store); logits sliced post-kernel.
    w2p = jnp.zeros((HEAD_HIDDEN, OUT_PAD), f32).at[:, :out_dim].set(w2)
    return {
        "w1": w1.astype(bf16),                 # [hid, 256] (transposed vs nn.Linear)
        "b1": jnp.zeros((1, HEAD_HIDDEN), f32),
        "w2": w2p.astype(bf16),                # [256, 128] zero-padded
        "b2": jnp.zeros((1, OUT_PAD), f32),
    }


# ----------------------------------------------------------------------------
# bertclassifier forward
# ----------------------------------------------------------------------------
def bertclassifier_forward(bert_params, head_params, src, src_mask, segment,
                           n_heads, out_dim):
    B, S = src.shape
    # TODO(synk): token/position/segment embedding gathers stay in plain JAX —
    # data-dependent gather has no clean BlockSpec equivalent at this scale.
    x = (bert_params["tok_emb"][src]
         + bert_params["pos_emb"][:S][None, :, :]
         + bert_params["seg_emb"][segment])
    x = x.astype(jnp.bfloat16)                                 # bf16 streaming
    mask = src_mask.astype(jnp.float32).reshape(B, 1, S)
    logits_padded = fused_bert_classifier(x, mask, bert_params, head_params,
                                          n_heads)             # [B, 128]
    return logits_padded[:, :out_dim]


if __name__ == "__main__":
    # Small deterministic config consistent with the module's forward.
    batch, seq, hid_dim, out_dim = 2, 8, 32, 4
    vocab, n_seg, n_heads, ffn = 50, 2, 4, 64
    assert hid_dim % n_heads == 0

    root = jax.random.PRNGKey(0)
    k_bert, k_head, k_src, k_seg = jax.random.split(root, 4)

    bert_params = init_bert_params(k_bert, vocab, seq, n_seg, hid_dim, ffn)
    head_params = init_head_params(k_head, hid_dim, out_dim)

    src = jax.random.randint(k_src, (batch, seq), 0, vocab, dtype=jnp.int32)
    segment = jax.random.randint(k_seg, (batch, seq), 0, n_seg, dtype=jnp.int32)
    src_mask = jnp.ones((batch, seq), dtype=jnp.int32)  # no padding

    out = bertclassifier_forward(bert_params, head_params, src, src_mask,
                                 segment, n_heads, out_dim)
    out = jax.block_until_ready(out)
    assert out.shape == (batch, out_dim), out.shape
    print("KERNEL_OK")
</pallas_src>

<mosaic_0001>
module attributes {stable_mosaic.version = 11 : i64} {
  func.func @fused_encoder_head_kernel(%arg0: i32, %arg1: memref<2x8x32xbf16, #tpu.memory_space<vmem>>, %arg2: memref<2x1x8xf32, #tpu.memory_space<vmem>>, %arg3: memref<32x96xbf16, #tpu.memory_space<vmem>>, %arg4: memref<32x32xbf16, #tpu.memory_space<vmem>>, %arg5: memref<1x32xf32, #tpu.memory_space<vmem>>, %arg6: memref<1x32xf32, #tpu.memory_space<vmem>>, %arg7: memref<32x64xbf16, #tpu.memory_space<vmem>>, %arg8: memref<1x64xf32, #tpu.memory_space<vmem>>, %arg9: memref<64x32xbf16, #tpu.memory_space<vmem>>, %arg10: memref<1x32xf32, #tpu.memory_space<vmem>>, %arg11: memref<1x32xf32, #tpu.memory_space<vmem>>, %arg12: memref<1x32xf32, #tpu.memory_space<vmem>>, %arg13: memref<32x256xbf16, #tpu.memory_space<vmem>>, %arg14: memref<1x256xf32, #tpu.memory_space<vmem>>, %arg15: memref<256x128xbf16, #tpu.memory_space<vmem>>, %arg16: memref<1x128xf32, #tpu.memory_space<vmem>>, %arg17: memref<2x128xf32, #tpu.memory_space<vmem>>) attributes {dimension_semantics = [#tpu.dimension_semantics<parallel>], iteration_bounds = array<i64: 1>, scalar_prefetch = 0 : i64, scratch_operands = 0 : i64, tpu.core_type = #tpu.core_type<tc>, window_params = [{transform_indices = @transform_0, window_bounds = array<i64: 2, 8, 32>}, {transform_indices = @transform_1, window_bounds = array<i64: 2, 1, 8>}, {pipeline_mode = #tpu.pipeline_mode<synchronous>, transform_indices = @transform_2, window_bounds = array<i64: 32, 96>}, {pipeline_mode = #tpu.pipeline_mode<synchronous>, transform_indices = @transform_3, window_bounds = array<i64: 32, 32>}, {pipeline_mode = #tpu.pipeline_mode<synchronous>, transform_indices = @transform_4, window_bounds = array<i64: 1, 32>}, {pipeline_mode = #tpu.pipeline_mode<synchronous>, transform_indices = @transform_5, window_bounds = array<i64: 1, 32>}, {pipeline_mode = #tpu.pipeline_mode<synchronous>, transform_indices = @transform_6, window_bounds = array<i64: 32, 64>}, {pipeline_mode = #tpu.pipeline_mode<synchronous>, transform_indices = @transform_7, window_bounds = array<i64: 1, 64>}, {pipeline_mode = #tpu.pipeline_mode<synchronous>, transform_indices = @transform_8, window_bounds = array<i64: 64, 32>}, {pipeline_mode = #tpu.pipeline_mode<synchronous>, transform_indices = @transform_9, window_bounds = array<i64: 1, 32>}, {pipeline_mode = #tpu.pipeline_mode<synchronous>, transform_indices = @transform_10, window_bounds = array<i64: 1, 32>}, {pipeline_mode = #tpu.pipeline_mode<synchronous>, transform_indices = @transform_11, window_bounds = array<i64: 1, 32>}, {pipeline_mode = #tpu.pipeline_mode<synchronous>, transform_indices = @transform_12, window_bounds = array<i64: 32, 256>}, {pipeline_mode = #tpu.pipeline_mode<synchronous>, transform_indices = @transform_13, window_bounds = array<i64: 1, 256>}, {pipeline_mode = #tpu.pipeline_mode<synchronous>, transform_indices = @transform_14, window_bounds = array<i64: 256, 128>}, {pipeline_mode = #tpu.pipeline_mode<synchronous>, transform_indices = @transform_15, window_bounds = array<i64: 1, 128>}, {transform_indices = @transform_16, window_bounds = array<i64: 2, 128>}]} {
    %c0 = arith.constant 0 : index
    %c0_0 = arith.constant 0 : index
    %c0_1 = arith.constant 0 : index
    %0 = vector.load %arg1[%c0, %c0_0, %c0_1] : memref<2x8x32xbf16, #tpu.memory_space<vmem>>, vector<2x8x32xbf16>
    %1 = arith.extf %0 : vector<2x8x32xbf16> to vector<2x8x32xf32>
    %c0_2 = arith.constant 0 : index
    %c0_3 = arith.constant 0 : index
    %c0_4 = arith.constant 0 : index
    %2 = vector.load %arg2[%c0_2, %c0_3, %c0_4] : memref<2x1x8xf32, #tpu.memory_space<vmem>>, vector<2x1x8xf32>
    %cst = arith.constant 0.000000e+00 : f32
    %3 = vector.broadcast %cst : f32 to vector<2x1x8xf32>
    %4 = arith.cmpf ogt, %2, %3 : vector<2x1x8xf32>
    %cst_5 = arith.constant 0.000000e+00 : f32
    %cst_6 = arith.constant -1.000000e+09 : f32
    %5 = vector.broadcast %cst_5 : f32 to vector<2x1x8xf32>
    %6 = vector.broadcast %cst_6 : f32 to vector<2x1x8xf32>
    %7 = arith.select %4, %5, %6 : vector<2x1x8xi1>, vector<2x1x8xf32>
    %8 = vector.shape_cast %0 : vector<2x8x32xbf16> to vector<16x32xbf16>
    %c0_7 = arith.constant 0 : index
    %c0_8 = arith.constant 0 : index
    %9 = vector.load %arg3[%c0_7, %c0_8] : memref<32x96xbf16, #tpu.memory_space<vmem>>, vector<32x96xbf16>
    %cst_9 = arith.constant dense<0.000000e+00> : vector<16x96xf32>
    %10 = tpu.matmul %8, %9, %cst_9 {dimension_numbers = #tpu.dot_dimension_numbers<[1], [0], [0], [1], [0, 0, 1, 1], [], []>} : vector<16x32xbf16>, vector<32x96xbf16>, vector<16x96xf32> -> vector<16x96xf32>
    %11 = vector.extract_strided_slice %10 {offsets = [0, 0], sizes = [16, 32], strides = [1, 1]} : vector<16x96xf32> to vector<16x32xf32>
    %12 = vector.shape_cast %11 : vector<16x32xf32> to vector<2x8x32xf32>
    %13 = arith.truncf %12 : vector<2x8x32xf32> to vector<2x8x32xbf16>
    %14 = vector.extract_strided_slice %10 {offsets = [0, 32], sizes = [16, 32], strides = [1, 1]} : vector<16x96xf32> to vector<16x32xf32>
    %15 = vector.shape_cast %14 : vector<16x32xf32> to vector<2x8x32xf32>
    %16 = arith.truncf %15 : vector<2x8x32xf32> to vector<2x8x32xbf16>
    %17 = vector.extract_strided_slice %10 {offsets = [0, 64], sizes = [16, 32], strides = [1, 1]} : vector<16x96xf32> to vector<16x32xf32>
    %18 = vector.shape_cast %17 : vector<16x32xf32> to vector<2x8x32xf32>
    %19 = arith.truncf %18 : vector<2x8x32xf32> to vector<2x8x32xbf16>
    %20 = vector.extract_strided_slice %13 {offsets = [0, 0, 0], sizes = [2, 8, 8], strides = [1, 1, 1]} : vector<2x8x32xbf16> to vector<2x8x8xbf16>
    %21 = vector.extract_strided_slice %16 {offsets = [0, 0, 0], sizes = [2, 8, 8], strides = [1, 1, 1]} : vector<2x8x32xbf16> to vector<2x8x8xbf16>
    %22 = vector.extract_strided_slice %19 {offsets = [0, 0, 0], sizes = [2, 8, 8], strides = [1, 1, 1]} : vector<2x8x32xbf16> to vector<2x8x8xbf16>
    "tpu.trace_start"() <{level = 10 : i32, message = "bqd,bkd->bqk"}> : () -> ()
    %cst_10 = arith.constant dense<0.000000e+00> : vector<2x8x8xf32>
    %23 = tpu.matmul %20, %21, %cst_10 {dimension_numbers = #tpu.dot_dimension_numbers<[2], [2], [1], [1], [0, 0, 0, 1, 1, 1], [0], [0]>} : vector<2x8x8xbf16>, vector<2x8x8xbf16>, vector<2x8x8xf32> -> vector<2x8x8xf32>
    "tpu.trace_stop"() : () -> ()
    %cst_11 = arith.constant 0.353553385 : f32
    %24 = vector.broadcast %cst_11 : f32 to vector<2x8x8xf32>
    %25 = arith.mulf %23, %24 : vector<2x8x8xf32>
    %26 = vector.broadcast %7 : vector<2x1x8xf32> to vector<2x8x8xf32>
    %27 = arith.addf %25, %26 : vector<2x8x8xf32>
    %cst_12 = arith.constant dense<0xFF800000> : vector<2x8xf32>
    %28 = vector.multi_reduction <maximumf>, %27, %cst_12 [2] : vector<2x8x8xf32> to vector<2x8xf32>
    %29 = vector.shape_cast %28 : vector<2x8xf32> to vector<2x8x1xf32>
    %30 = vector.broadcast %29 : vector<2x8x1xf32> to vector<2x8x8xf32>
    %31 = arith.subf %27, %30 : vector<2x8x8xf32>
    %32 = math.exp %31 : vector<2x8x8xf32>
    %cst_13 = arith.constant dense<0.000000e+00> : vector<2x8xf32>
    %33 = vector.multi_reduction <add>, %32, %cst_13 [2] : vector<2x8x8xf32> to vector<2x8xf32>
    %34 = vector.shape_cast %33 : vector<2x8xf32> to vector<2x8x1xf32>
    %35 = arith.truncf %32 : vector<2x8x8xf32> to vector<2x8x8xbf16>
    "tpu.trace_start"() <{level = 10 : i32, message = "bqk,bkd->bqd"}> : () -> ()
    %cst_14 = arith.constant dense<0.000000e+00> : vector<2x8x8xf32>
    %36 = tpu.matmul %35, %22, %cst_14 {dimension_numbers = #tpu.dot_dimension_numbers<[2], [1], [1], [2], [0, 0, 0, 1, 1, 2], [0], [0]>} : vector<2x8x8xbf16>, vector<2x8x8xbf16>, vector<2x8x8xf32> -> vector<2x8x8xf32>
    "tpu.trace_stop"() : () -> ()
    %37 = tpu.reciprocal %34 {approx = true} : vector<2x8x1xf32> -> vector<2x8x1xf32>
    %38 = vector.broadcast %37 : vector<2x8x1xf32> to vector<2x8x8xf32>
    %39 = arith.mulf %36, %38 : vector<2x8x8xf32>
    %40 = arith.truncf %39 : vector<2x8x8xf32> to vector<2x8x8xbf16>
    %41 = vector.extract_strided_slice %13 {offsets = [0, 0, 8], sizes = [2, 8, 8], strides = [1, 1, 1]} : vector<2x8x32xbf16> to vector<2x8x8xbf16>
    %42 = vector.extract_strided_slice %16 {offsets = [0, 0, 8], sizes = [2, 8, 8], strides = [1, 1, 1]} : vector<2x8x32xbf16> to vector<2x8x8xbf16>
    %43 = vector.extract_strided_slice %19 {offsets = [0, 0, 8], sizes = [2, 8, 8], strides = [1, 1, 1]} : vector<2x8x32xbf16> to vector<2x8x8xbf16>
    "tpu.trace_start"() <{level = 10 : i32, message = "bqd,bkd->bqk"}> : () -> ()
    %cst_15 = arith.constant dense<0.000000e+00> : vector<2x8x8xf32>
    %44 = tpu.matmul %41, %42, %cst_15 {dimension_numbers = #tpu.dot_dimension_numbers<[2], [2], [1], [1], [0, 0, 0, 1, 1, 1], [0], [0]>} : vector<2x8x8xbf16>, vector<2x8x8xbf16>, vector<2x8x8xf32> -> vector<2x8x8xf32>
    "tpu.trace_stop"() : () -> ()
    %cst_16 = arith.constant 0.353553385 : f32
    %45 = vector.broadcast %cst_16 : f32 to vector<2x8x8xf32>
    %46 = arith.mulf %44, %45 : vector<2x8x8xf32>
    %47 = vector.broadcast %7 : vector<2x1x8xf32> to vector<2x8x8xf32>
    %48 = arith.addf %46, %47 : vector<2x8x8xf32>
    %cst_17 = arith.constant dense<0xFF800000> : vector<2x8xf32>
    %49 = vector.multi_reduction <maximumf>, %48, %cst_17 [2] : vector<2x8x8xf32> to vector<2x8xf32>
    %50 = vector.shape_cast %49 : vector<2x8xf32> to vector<2x8x1xf32>
    %51 = vector.broadcast %50 : vector<2x8x1xf32> to vector<2x8x8xf32>
    %52 = arith.subf %48, %51 : vector<2x8x8xf32>
    %53 = math.exp %52 : vector<2x8x8xf32>
    %cst_18 = arith.constant dense<0.000000e+00> : vector<2x8xf32>
    %54 = vector.multi_reduction <add>, %53, %cst_18 [2] : vector<2x8x8xf32> to vector<2x8xf32>
    %55 = vector.shape_cast %54 : vector<2x8xf32> to vector<2x8x1xf32>
    %56 = arith.truncf %53 : vector<2x8x8xf32> to vector<2x8x8xbf16>
    "tpu.trace_start"() <{level = 10 : i32, message = "bqk,bkd->bqd"}> : () -> ()
    %cst_19 = arith.constant dense<0.000000e+00> : vector<2x8x8xf32>
    %57 = tpu.matmul %56, %43, %cst_19 {dimension_numbers = #tpu.dot_dimension_numbers<[2], [1], [1], [2], [0, 0, 0, 1, 1, 2], [0], [0]>} : vector<2x8x8xbf16>, vector<2x8x8xbf16>, vector<2x8x8xf32> -> vector<2x8x8xf32>
    "tpu.trace_stop"() : () -> ()
    %58 = tpu.reciprocal %55 {approx = true} : vector<2x8x1xf32> -> vector<2x8x1xf32>
    %59 = vector.broadcast %58 : vector<2x8x1xf32> to vector<2x8x8xf32>
    %60 = arith.mulf %57, %59 : vector<2x8x8xf32>
    %61 = arith.truncf %60 : vector<2x8x8xf32> to vector<2x8x8xbf16>
    %62 = vector.extract_strided_slice %13 {offsets = [0, 0, 16], sizes = [2, 8, 8], strides = [1, 1, 1]} : vector<2x8x32xbf16> to vector<2x8x8xbf16>
    %63 = vector.extract_strided_slice %16 {offsets = [0, 0, 16], sizes = [2, 8, 8], strides = [1, 1, 1]} : vector<2x8x32xbf16> to vector<2x8x8xbf16>
    %64 = vector.extract_strided_slice %19 {offsets = [0, 0, 16], sizes = [2, 8, 8], strides = [1, 1, 1]} : vector<2x8x32xbf16> to vector<2x8x8xbf16>
    "tpu.trace_start"() <{level = 10 : i32, message = "bqd,bkd->bqk"}> : () -> ()
    %cst_20 = arith.constant dense<0.000000e+00> : vector<2x8x8xf32>
    %65 = tpu.matmul %62, %63, %cst_20 {dimension_numbers = #tpu.dot_dimension_numbers<[2], [2], [1], [1], [0, 0, 0, 1, 1, 1], [0], [0]>} : vector<2x8x8xbf16>, vector<2x8x8xbf16>, vector<2x8x8xf32> -> vector<2x8x8xf32>
    "tpu.trace_stop"() : () -> ()
    %cst_21 = arith.constant 0.353553385 : f32
    %66 = vector.broadcast %cst_21 : f32 to vector<2x8x8xf32>
    %67 = arith.mulf %65, %66 : vector<2x8x8xf32>
    %68 = vector.broadcast %7 : vector<2x1x8xf32> to vector<2x8x8xf32>
    %69 = arith.addf %67, %68 : vector<2x8x8xf32>
    %cst_22 = arith.constant dense<0xFF800000> : vector<2x8xf32>
    %70 = vector.multi_reduction <maximumf>, %69, %cst_22 [2] : vector<2x8x8xf32> to vector<2x8xf32>
    %71 = vector.shape_cast %70 : vector<2x8xf32> to vector<2x8x1xf32>
    %72 = vector.broadcast %71 : vector<2x8x1xf32> to vector<2x8x8xf32>
    %73 = arith.subf %69, %72 : vector<2x8x8xf32>
    %74 = math.exp %73 : vector<2x8x8xf32>
    %cst_23 = arith.constant dense<0.000000e+00> : vector<2x8xf32>
    %75 = vector.multi_reduction <add>, %74, %cst_23 [2] : vector<2x8x8xf32> to vector<2x8xf32>
    %76 = vector.shape_cast %75 : vector<2x8xf32> to vector<2x8x1xf32>
    %77 = arith.truncf %74 : vector<2x8x8xf32> to vector<2x8x8xbf16>
    "tpu.trace_start"() <{level = 10 : i32, message = "bqk,bkd->bqd"}> : () -> ()
    %cst_24 = arith.constant dense<0.000000e+00> : vector<2x8x8xf32>
    %78 = tpu.matmul %77, %64, %cst_24 {dimension_numbers = #tpu.dot_dimension_numbers<[2], [1], [1], [2], [0, 0, 0, 1, 1, 2], [0], [0]>} : vector<2x8x8xbf16>, vector<2x8x8xbf16>, vector<2x8x8xf32> -> vector<2x8x8xf32>
    "tpu.trace_stop"() : () -> ()
    %79 = tpu.reciprocal %76 {approx = true} : vector<2x8x1xf32> -> vector<2x8x1xf32>
    %80 = vector.broadcast %79 : vector<2x8x1xf32> to vector<2x8x8xf32>
    %81 = arith.mulf %78, %80 : vector<2x8x8xf32>
    %82 = arith.truncf %81 : vector<2x8x8xf32> to vector<2x8x8xbf16>
    %83 = vector.extract_strided_slice %13 {offsets = [0, 0, 24], sizes = [2, 8, 8], strides = [1, 1, 1]} : vector<2x8x32xbf16> to vector<2x8x8xbf16>
    %84 = vector.extract_strided_slice %16 {offsets = [0, 0, 24], sizes = [2, 8, 8], strides = [1, 1, 1]} : vector<2x8x32xbf16> to vector<2x8x8xbf16>
    %85 = vector.extract_strided_slice %19 {offsets = [0, 0, 24], sizes = [2, 8, 8], strides = [1, 1, 1]} : vector<2x8x32xbf16> to vector<2x8x8xbf16>
    "tpu.trace_start"() <{level = 10 : i32, message = "bqd,bkd->bqk"}> : () -> ()
    %cst_25 = arith.constant dense<0.000000e+00> : vector<2x8x8xf32>
    %86 = tpu.matmul %83, %84, %cst_25 {dimension_numbers = #tpu.dot_dimension_numbers<[2], [2], [1], [1], [0, 0, 0, 1, 1, 1], [0], [0]>} : vector<2x8x8xbf16>, vector<2x8x8xbf16>, vector<2x8x8xf32> -> vector<2x8x8xf32>
    "tpu.trace_stop"() : () -> ()
    %cst_26 = arith.constant 0.353553385 : f32
    %87 = vector.broadcast %cst_26 : f32 to vector<2x8x8xf32>
    %88 = arith.mulf %86, %87 : vector<2x8x8xf32>
    %89 = vector.broadcast %7 : vector<2x1x8xf32> to vector<2x8x8xf32>
    %90 = arith.addf %88, %89 : vector<2x8x8xf32>
    %cst_27 = arith.constant dense<0xFF800000> : vector<2x8xf32>
    %91 = vector.multi_reduction <maximumf>, %90, %cst_27 [2] : vector<2x8x8xf32> to vector<2x8xf32>
    %92 = vector.shape_cast %91 : vector<2x8xf32> to vector<2x8x1xf32>
    %93 = vector.broadcast %92 : vector<2x8x1xf32> to vector<2x8x8xf32>
    %94 = arith.subf %90, %93 : vector<2x8x8xf32>
    %95 = math.exp %94 : vector<2x8x8xf32>
    %cst_28 = arith.constant dense<0.000000e+00> : vector<2x8xf32>
    %96 = vector.multi_reduction <add>, %95, %cst_28 [2] : vector<2x8x8xf32> to vector<2x8xf32>
    %97 = vector.shape_cast %96 : vector<2x8xf32> to vector<2x8x1xf32>
    %98 = arith.truncf %95 : vector<2x8x8xf32> to vector<2x8x8xbf16>
    "tpu.trace_start"() <{level = 10 : i32, message = "bqk,bkd->bqd"}> : () -> ()
    %cst_29 = arith.constant dense<0.000000e+00> : vector<2x8x8xf32>
    %99 = tpu.matmul %98, %85, %cst_29 {dimension_numbers = #tpu.dot_dimension_numbers<[2], [1], [1], [2], [0, 0, 0, 1, 1, 2], [0], [0]>} : vector<2x8x8xbf16>, vector<2x8x8xbf16>, vector<2x8x8xf32> -> vector<2x8x8xf32>
    "tpu.trace_stop"() : () -> ()
    %100 = tpu.reciprocal %97 {approx = true} : vector<2x8x1xf32> -> vector<2x8x1xf32>
    %101 = vector.broadcast %100 : vector<2x8x1xf32> to vector<2x8x8xf32>
    %102 = arith.mulf %99, %101 : vector<2x8x8xf32>
    %103 = arith.truncf %102 : vector<2x8x8xf32> to vector<2x8x8xbf16>
    %104 = tpu.concatenate %40, %61, %82, %103 in 2 : vector<2x8x8xbf16>, vector<2x8x8xbf16>, vector<2x8x8xbf16>, vector<2x8x8xbf16> -> vector<2x8x32xbf16>
    %105 = vector.shape_cast %104 : vector<2x8x32xbf16> to vector<16x32xbf16>
    %c0_30 = arith.constant 0 : index
    %c0_31 = arith.constant 0 : index
    %106 = vector.load %arg4[%c0_30, %c0_31] : memref<32x32xbf16, #tpu.memory_space<vmem>>, vector<32x32xbf16>
    %cst_32 = arith.constant dense<0.000000e+00> : vector<16x32xf32>
    %107 = tpu.matmul %105, %106, %cst_32 {dimension_numbers = #tpu.dot_dimension_numbers<[1], [0], [0], [1], [0, 0, 1, 1], [], []>} : vector<16x32xbf16>, vector<32x32xbf16>, vector<16x32xf32> -> vector<16x32xf32>
    %108 = vector.shape_cast %107 : vector<16x32xf32> to vector<2x8x32xf32>
    %109 = arith.addf %1, %108 : vector<2x8x32xf32>
    %c0_33 = arith.constant 0 : index
    %c0_34 = arith.constant 0 : index
    %110 = vector.load %arg5[%c0_33, %c0_34] : memref<1x32xf32, #tpu.memory_space<vmem>>, vector<1x32xf32>
    %c0_35 = arith.constant 0 : index
    %c0_36 = arith.constant 0 : index
    %111 = vector.load %arg6[%c0_35, %c0_36] : memref<1x32xf32, #tpu.memory_space<vmem>>, vector<1x32xf32>
    %cst_37 = arith.constant dense<0.000000e+00> : vector<2x8xf32>
    %112 = vector.multi_reduction <add>, %109, %cst_37 [2] : vector<2x8x32xf32> to vector<2x8xf32>
    %113 = vector.shape_cast %112 : vector<2x8xf32> to vector<2x8x1xf32>
    %cst_38 = arith.constant 3.200000e+01 : f32
    %114 = vector.broadcast %cst_38 : f32 to vector<2x8x1xf32>
    %115 = arith.divf %113, %114 : vector<2x8x1xf32>
    %116 = vector.broadcast %115 : vector<2x8x1xf32> to vector<2x8x32xf32>
    %117 = arith.subf %109, %116 : vector<2x8x32xf32>
    %118 = arith.mulf %117, %117 : vector<2x8x32xf32>
    %cst_39 = arith.constant dense<0.000000e+00> : vector<2x8xf32>
    %119 = vector.multi_reduction <add>, %118, %cst_39 [2] : vector<2x8x32xf32> to vector<2x8xf32>
    %120 = vector.shape_cast %119 : vector<2x8xf32> to vector<2x8x1xf32>
    %cst_40 = arith.constant 3.200000e+01 : f32
    %121 = vector.broadcast %cst_40 : f32 to vector<2x8x1xf32>
    %122 = arith.divf %120, %121 : vector<2x8x1xf32>
    %123 = vector.broadcast %115 : vector<2x8x1xf32> to vector<2x8x32xf32>
    %124 = arith.subf %109, %123 : vector<2x8x32xf32>
    %cst_41 = arith.constant 9.99999974E-6 : f32
    %125 = vector.broadcast %cst_41 : f32 to vector<2x8x1xf32>
    %126 = arith.addf %122, %125 : vector<2x8x1xf32>
    %127 = math.rsqrt %126 : vector<2x8x1xf32>
    %128 = vector.broadcast %127 : vector<2x8x1xf32> to vector<2x8x32xf32>
    %129 = arith.mulf %124, %128 : vector<2x8x32xf32>
    %130 = vector.shape_cast %110 : vector<1x32xf32> to vector<1x1x32xf32>
    %131 = vector.broadcast %130 : vector<1x1x32xf32> to vector<2x8x32xf32>
    %132 = arith.mulf %129, %131 : vector<2x8x32xf32>
    %133 = vector.shape_cast %111 : vector<1x32xf32> to vector<1x1x32xf32>
    %134 = vector.broadcast %133 : vector<1x1x32xf32> to vector<2x8x32xf32>
    %135 = arith.addf %132, %134 : vector<2x8x32xf32>
    %136 = vector.shape_cast %135 : vector<2x8x32xf32> to vector<16x32xf32>
    %137 = arith.truncf %136 : vector<16x32xf32> to vector<16x32xbf16>
    %c0_42 = arith.constant 0 : index
    %c0_43 = arith.constant 0 : index
    %138 = vector.load %arg7[%c0_42, %c0_43] : memref<32x64xbf16, #tpu.memory_space<vmem>>, vector<32x64xbf16>
    %cst_44 = arith.constant dense<0.000000e+00> : vector<16x64xf32>
    %139 = tpu.matmul %137, %138, %cst_44 {dimension_numbers = #tpu.dot_dimension_numbers<[1], [0], [0], [1], [0, 0, 1, 1], [], []>} : vector<16x32xbf16>, vector<32x64xbf16>, vector<16x64xf32> -> vector<16x64xf32>
    %c0_45 = arith.constant 0 : index
    %c0_46 = arith.constant 0 : index
    %140 = vector.load %arg8[%c0_45, %c0_46] : memref<1x64xf32, #tpu.memory_space<vmem>>, vector<1x64xf32>
    %141 = vector.broadcast %140 : vector<1x64xf32> to vector<16x64xf32>
    %142 = arith.addf %139, %141 : vector<16x64xf32>
    %cst_47 = arith.constant 0.000000e+00 : f32
    %143 = vector.broadcast %cst_47 : f32 to vector<16x64xf32>
    %144 = arith.maximumf %142, %143 : vector<16x64xf32>
    %145 = arith.truncf %144 : vector<16x64xf32> to vector<16x64xbf16>
    %c0_48 = arith.constant 0 : index
    %c0_49 = arith.constant 0 : index
    %146 = vector.load %arg9[%c0_48, %c0_49] : memref<64x32xbf16, #tpu.memory_space<vmem>>, vector<64x32xbf16>
    %cst_50 = arith.constant dense<0.000000e+00> : vector<16x32xf32>
    %147 = tpu.matmul %145, %146, %cst_50 {dimension_numbers = #tpu.dot_dimension_numbers<[1], [0], [0], [1], [0, 0, 1, 1], [], []>} : vector<16x64xbf16>, vector<64x32xbf16>, vector<16x32xf32> -> vector<16x32xf32>
    %148 = vector.shape_cast %147 : vector<16x32xf32> to vector<2x8x32xf32>
    %149 = arith.addf %135, %148 : vector<2x8x32xf32>
    %c0_51 = arith.constant 0 : index
    %c0_52 = arith.constant 0 : index
    %150 = vector.load %arg10[%c0_51, %c0_52] : memref<1x32xf32, #tpu.memory_space<vmem>>, vector<1x32xf32>
    %151 = vector.shape_cast %150 : vector<1x32xf32> to vector<1x1x32xf32>
    %152 = vector.broadcast %151 : vector<1x1x32xf32> to vector<2x8x32xf32>
    %153 = arith.addf %149, %152 : vector<2x8x32xf32>
    %c0_53 = arith.constant 0 : index
    %c0_54 = arith.constant 0 : index
    %154 = vector.load %arg11[%c0_53, %c0_54] : memref<1x32xf32, #tpu.memory_space<vmem>>, vector<1x32xf32>
    %c0_55 = arith.constant 0 : index
    %c0_56 = arith.constant 0 : index
    %155 = vector.load %arg12[%c0_55, %c0_56] : memref<1x32xf32, #tpu.memory_space<vmem>>, vector<1x32xf32>
    %cst_57 = arith.constant dense<0.000000e+00> : vector<2x8xf32>
    %156 = vector.multi_reduction <add>, %153, %cst_57 [2] : vector<2x8x32xf32> to vector<2x8xf32>
    %157 = vector.shape_cast %156 : vector<2x8xf32> to vector<2x8x1xf32>
    %cst_58 = arith.constant 3.200000e+01 : f32
    %158 = vector.broadcast %cst_58 : f32 to vector<2x8x1xf32>
    %159 = arith.divf %157, %158 : vector<2x8x1xf32>
    %160 = vector.broadcast %159 : vector<2x8x1xf32> to vector<2x8x32xf32>
    %161 = arith.subf %153, %160 : vector<2x8x32xf32>
    %162 = arith.mulf %161, %161 : vector<2x8x32xf32>
    %cst_59 = arith.constant dense<0.000000e+00> : vector<2x8xf32>
    %163 = vector.multi_reduction <add>, %162, %cst_59 [2] : vector<2x8x32xf32> to vector<2x8xf32>
    %164 = vector.shape_cast %163 : vector<2x8xf32> to vector<2x8x1xf32>
    %cst_60 = arith.constant 3.200000e+01 : f32
    %165 = vector.broadcast %cst_60 : f32 to vector<2x8x1xf32>
    %166 = arith.divf %164, %165 : vector<2x8x1xf32>
    %167 = vector.broadcast %159 : vector<2x8x1xf32> to vector<2x8x32xf32>
    %168 = arith.subf %153, %167 : vector<2x8x32xf32>
    %cst_61 = arith.constant 9.99999974E-6 : f32
    %169 = vector.broadcast %cst_61 : f32 to vector<2x8x1xf32>
    %170 = arith.addf %166, %169 : vector<2x8x1xf32>
    %171 = math.rsqrt %170 : vector<2x8x1xf32>
    %172 = vector.broadcast %171 : vector<2x8x1xf32> to vector<2x8x32xf32>
    %173 = arith.mulf %168, %172 : vector<2x8x32xf32>
    %174 = vector.shape_cast %154 : vector<1x32xf32> to vector<1x1x32xf32>
    %175 = vector.broadcast %174 : vector<1x1x32xf32> to vector<2x8x32xf32>
    %176 = arith.mulf %173, %175 : vector<2x8x32xf32>
    %177 = vector.shape_cast %155 : vector<1x32xf32> to vector<1x1x32xf32>
    %178 = vector.broadcast %177 : vector<1x1x32xf32> to vector<2x8x32xf32>
    %179 = arith.addf %176, %178 : vector<2x8x32xf32>
    %180 = vector.extract_strided_slice %179 {offsets = [0, 0, 0], sizes = [2, 1, 32], strides = [1, 1, 1]} : vector<2x8x32xf32> to vector<2x1x32xf32>
    %181 = vector.shape_cast %180 : vector<2x1x32xf32> to vector<2x32xf32>
    %182 = arith.truncf %181 : vector<2x32xf32> to vector<2x32xbf16>
    %c0_62 = arith.constant 0 : index
    %c0_63 = arith.constant 0 : index
    %183 = vector.load %arg13[%c0_62, %c0_63] : memref<32x256xbf16, #tpu.memory_space<vmem>>, vector<32x256xbf16>
    %cst_64 = arith.constant dense<0.000000e+00> : vector<2x256xf32>
    %184 = tpu.matmul %182, %183, %cst_64 {dimension_numbers = #tpu.dot_dimension_numbers<[1], [0], [0], [1], [0, 0, 1, 1], [], []>} : vector<2x32xbf16>, vector<32x256xbf16>, vector<2x256xf32> -> vector<2x256xf32>
    %c0_65 = arith.constant 0 : index
    %c0_66 = arith.constant 0 : index
    %185 = vector.load %arg14[%c0_65, %c0_66] : memref<1x256xf32, #tpu.memory_space<vmem>>, vector<1x256xf32>
    %186 = vector.broadcast %185 : vector<1x256xf32> to vector<2x256xf32>
    %187 = arith.addf %184, %186 : vector<2x256xf32>
    %cst_67 = arith.constant 0.000000e+00 : f32
    %188 = vector.broadcast %cst_67 : f32 to vector<2x256xf32>
    %189 = arith.maximumf %187, %188 : vector<2x256xf32>
    %190 = arith.truncf %189 : vector<2x256xf32> to vector<2x256xbf16>
    %c0_68 = arith.constant 0 : index
    %c0_69 = arith.constant 0 : index
    %191 = vector.load %arg15[%c0_68, %c0_69] : memref<256x128xbf16, #tpu.memory_space<vmem>>, vector<256x128xbf16>
    %cst_70 = arith.constant dense<0.000000e+00> : vector<2x128xf32>
    %192 = tpu.matmul %190, %191, %cst_70 {dimension_numbers = #tpu.dot_dimension_numbers<[1], [0], [0], [1], [0, 0, 1, 1], [], []>} : vector<2x256xbf16>, vector<256x128xbf16>, vector<2x128xf32> -> vector<2x128xf32>
    %c0_71 = arith.constant 0 : index
    %c0_72 = arith.constant 0 : index
    %193 = vector.load %arg16[%c0_71, %c0_72] : memref<1x128xf32, #tpu.memory_space<vmem>>, vector<1x128xf32>
    %194 = vector.broadcast %193 : vector<1x128xf32> to vector<2x128xf32>
    %195 = arith.addf %192, %194 : vector<2x128xf32>
    %c0_73 = arith.constant 0 : index
    %c0_74 = arith.constant 0 : index
    %196 = vector.load %arg17[%c0_73, %c0_74] : memref<2x128xf32, #tpu.memory_space<vmem>>, vector<2x128xf32>
    tpu.vector_store %arg17[%c0_73, %c0_74], %195 {strides = array<i32>} : memref<2x128xf32, #tpu.memory_space<vmem>>, vector<2x128xf32>,
    return
  }
  func.func @transform_0(%arg0: i32) -> (i32, i32, i32) {
    %c0_i32 = arith.constant 0 : i32
    %c0_i32_0 = arith.constant 0 : i32
    %c0_i32_1 = arith.constant 0 : i32
    return %arg0, %c0_i32, %c0_i32_0 : i32, i32, i32
  }
  func.func @transform_1(%arg0: i32) -> (i32, i32, i32) {
    %c0_i32 = arith.constant 0 : i32
    %c0_i32_0 = arith.constant 0 : i32
    %c0_i32_1 = arith.constant 0 : i32
    return %arg0, %c0_i32, %c0_i32_0 : i32, i32, i32
  }
  func.func @transform_2(%arg0: i32) -> (i32, i32) {
    %c0_i32 = arith.constant 0 : i32
    %c0_i32_0 = arith.constant 0 : i32
    %c0_i32_1 = arith.constant 0 : i32
    return %c0_i32, %c0_i32_0 : i32, i32
  }
  func.func @transform_3(%arg0: i32) -> (i32, i32) {
    %c0_i32 = arith.constant 0 : i32
    %c0_i32_0 = arith.constant 0 : i32
    %c0_i32_1 = arith.constant 0 : i32
    return %c0_i32, %c0_i32_0 : i32, i32
  }
  func.func @transform_4(%arg0: i32) -> (i32, i32) {
    %c0_i32 = arith.constant 0 : i32
    %c0_i32_0 = arith.constant 0 : i32
    %c0_i32_1 = arith.constant 0 : i32
    return %c0_i32, %c0_i32_0 : i32, i32
  }
  func.func @transform_5(%arg0: i32) -> (i32, i32) {
    %c0_i32 = arith.constant 0 : i32
    %c0_i32_0 = arith.constant 0 : i32
    %c0_i32_1 = arith.constant 0 : i32
    return %c0_i32, %c0_i32_0 : i32, i32
  }
  func.func @transform_6(%arg0: i32) -> (i32, i32) {
    %c0_i32 = arith.constant 0 : i32
    %c0_i32_0 = arith.constant 0 : i32
    %c0_i32_1 = arith.constant 0 : i32
    return %c0_i32, %c0_i32_0 : i32, i32
  }
  func.func @transform_7(%arg0: i32) -> (i32, i32) {
    %c0_i32 = arith.constant 0 : i32
    %c0_i32_0 = arith.constant 0 : i32
    %c0_i32_1 = arith.constant 0 : i32
    return %c0_i32, %c0_i32_0 : i32, i32
  }
  func.func @transform_8(%arg0: i32) -> (i32, i32) {
    %c0_i32 = arith.constant 0 : i32
    %c0_i32_0 = arith.constant 0 : i32
    %c0_i32_1 = arith.constant 0 : i32
    return %c0_i32, %c0_i32_0 : i32, i32
  }
  func.func @transform_9(%arg0: i32) -> (i32, i32) {
    %c0_i32 = arith.constant 0 : i32
    %c0_i32_0 = arith.constant 0 : i32
    %c0_i32_1 = arith.constant 0 : i32
    return %c0_i32, %c0_i32_0 : i32, i32
  }
  func.func @transform_10(%arg0: i32) -> (i32, i32) {
    %c0_i32 = arith.constant 0 : i32
    %c0_i32_0 = arith.constant 0 : i32
    %c0_i32_1 = arith.constant 0 : i32
    return %c0_i32, %c0_i32_0 : i32, i32
  }
  func.func @transform_11(%arg0: i32) -> (i32, i32) {
    %c0_i32 = arith.constant 0 : i32
    %c0_i32_0 = arith.constant 0 : i32
    %c0_i32_1 = arith.constant 0 : i32
    return %c0_i32, %c0_i32_0 : i32, i32
  }
  func.func @transform_12(%arg0: i32) -> (i32, i32) {
    %c0_i32 = arith.constant 0 : i32
    %c0_i32_0 = arith.constant 0 : i32
    %c0_i32_1 = arith.constant 0 : i32
    return %c0_i32, %c0_i32_0 : i32, i32
  }
  func.func @transform_13(%arg0: i32) -> (i32, i32) {
    %c0_i32 = arith.constant 0 : i32
    %c0_i32_0 = arith.constant 0 : i32
    %c0_i32_1 = arith.constant 0 : i32
    return %c0_i32, %c0_i32_0 : i32, i32
  }
  func.func @transform_14(%arg0: i32) -> (i32, i32) {
    %c0_i32 = arith.constant 0 : i32
    %c0_i32_0 = arith.constant 0 : i32
    %c0_i32_1 = arith.constant 0 : i32
    return %c0_i32, %c0_i32_0 : i32, i32
  }
  func.func @transform_15(%arg0: i32) -> (i32, i32) {
    %c0_i32 = arith.constant 0 : i32
    %c0_i32_0 = arith.constant 0 : i32
    %c0_i32_1 = arith.constant 0 : i32
    return %c0_i32, %c0_i32_0 : i32, i32
  }
  func.func @transform_16(%arg0: i32) -> (i32, i32) {
    %c0_i32 = arith.constant 0 : i32
    %c0_i32_0 = arith.constant 0 : i32
    return %arg0, %c0_i32 : i32, i32
  }
}

</mosaic_0001>

<llo_original>
// kernel: tpu_custom_call.1
$region0: #{tpu_custom_call.1}
  #allocation0 [shape = 'u32[]', space=smem, size = 0x4, offset = 0x4, fixed_abs, tag = 'smem constant byte address 0x4 - core index']
  #allocation1 [shape = 'u32[144,128]{1,0:T(1,128)}', space=vmem, size = 0x12000, scoped, tag = 'internal scratch']
  %s0 = inlined_call_operand.vmem [shape: bf16[2,8,32], index: 0, kind: input, shape index: {}]
  %s1 = inlined_call_operand.vmem [shape: f32[2,1,8], index: 1, kind: input, shape index: {}]
  %s2 = inlined_call_operand.vmem [shape: bf16[32,96], index: 2, kind: input, shape index: {}]
  %s3 = inlined_call_operand.hbm [shape: bf16[32,32], index: 3, kind: input, shape index: {}]
  %s4 = inlined_call_operand.vmem [shape: f32[1,32], index: 4, kind: input, shape index: {}]
  %s5 = inlined_call_operand.vmem [shape: f32[1,32], index: 5, kind: input, shape index: {}]
  %s6 = inlined_call_operand.hbm [shape: bf16[32,64], index: 6, kind: input, shape index: {}]
  %s7 = inlined_call_operand.hbm [shape: f32[1,64], index: 7, kind: input, shape index: {}]
  %s8 = inlined_call_operand.vmem [shape: bf16[64,32], index: 8, kind: input, shape index: {}]
  %s9 = inlined_call_operand.vmem [shape: f32[1,32], index: 9, kind: input, shape index: {}]
  %s10 = inlined_call_operand.vmem [shape: f32[1,32], index: 10, kind: input, shape index: {}]
  %s11 = inlined_call_operand.vmem [shape: f32[1,32], index: 11, kind: input, shape index: {}]
  %s12 = inlined_call_operand.vmem [shape: bf16[32,256], index: 12, kind: input, shape index: {}]
  %s13 = inlined_call_operand.vmem [shape: f32[1,256], index: 13, kind: input, shape index: {}]
  %s14 = inlined_call_operand.hbm [shape: bf16[256,128], index: 14, kind: input, shape index: {}]
  %s15 = inlined_call_operand.vmem [shape: f32[1,128], index: 15, kind: input, shape index: {}]
  %s16 = inlined_call_operand.hbm [shape: f32[2,128], index: 16, kind: output, shape index: {}]
  %s17 = sld [smem:[#allocation0]]
  $region90: #{tpu_custom_call.1} parent=0
    _
  %s19 = ssub.s32 1, %s17
  %s20 = scalar_select 0, %s19, %s17
  $region1: #{tpu_custom_call.1} parent=0
    #allocation2 [shape = 'u8[8192]{0}', space=vmem, size = 0x2000, scoped, tag = 'input window, operand 3, single buffered']
    #allocation3 [shape = 's32[1]{0}', space=sflag, size = 0x4, scoped, tag = 'scoped memory for tpu_custom_call.1']
    #allocation4 [shape = 's32[1]{0}', space=sflag, size = 0x4, scoped, tag = 'scoped memory for tpu_custom_call.1']
    #allocation5 [shape = 'u8[8192]{0}', space=vmem, size = 0x2000, scoped, tag = 'input window, operand 6, single buffered']
    #allocation6 [shape = 's32[1]{0}', space=sflag, size = 0x4, scoped, tag = 'scoped memory for tpu_custom_call.1']
    #allocation7 [shape = 'u8[512]{0}', space=vmem, size = 0x400, scoped, tag = 'input window, operand 7, single buffered']
    #allocation8 [shape = 'u8[65536]{0}', space=vmem, size = 0x10000, scoped, tag = 'input window, operand 14, single buffered']
    #allocation9 [shape = 's32[1]{0}', space=sflag, size = 0x4, scoped, tag = 'scoped memory for tpu_custom_call.1']
    #allocation10 [shape = 'u8[1024]{0}', space=vmem, size = 0x400, scoped, tag = 'output window, operand 0, single buffered']
    %21 = vsyncpa [#allocation3], 0
    %22 = vsyncpa [#allocation6], 0
    %23 = vsyncpa [#allocation9], 0
    %24 = vsyncpa [#allocation4], 0
    // Predicated region
    $region2: #{tpu_custom_call.1} parent=1 // pred_check
      _
    $region3: #{tpu_custom_call.1} parent=1 // pred_check_branch
      %26 = sbr.rel (0) target = $region5
    $region4: #{tpu_custom_call.1} parent=1 // pred_region
      _
    $region5: #{tpu_custom_call.1} parent=1 // pred_fallthru
      _
    // Predicated region
    $region6: #{tpu_custom_call.1} parent=1 // pred_check
      _
    $region7: #{tpu_custom_call.1} parent=1 // pred_check_branch
      %28 = sbr.rel (0) target = $region9
    $region8: #{tpu_custom_call.1} parent=1 // pred_region
      _
    $region9: #{tpu_custom_call.1} parent=1 // pred_fallthru
      _
    // Predicated region
    $region10: #{tpu_custom_call.1} parent=1 // pred_check
      _
    $region11: #{tpu_custom_call.1} parent=1 // pred_check_branch
      %30 = sbr.rel (0) target = $region13
    $region12: #{tpu_custom_call.1} parent=1 // pred_region
      _
    $region13: #{tpu_custom_call.1} parent=1 // pred_fallthru
      _
    // Predicated region
    $region14: #{tpu_custom_call.1} parent=1 // pred_check
      _
    $region15: #{tpu_custom_call.1} parent=1 // pred_check_branch
      %32 = sbr.rel (0) target = $region17
    $region16: #{tpu_custom_call.1} parent=1 // pred_region
      %s34 = ssub.s32 256, 256
      %35 = vsyncadd [#allocation3], %s34
      %s36 = sshll.u32 [#allocation2], 4
      %s37 = int_to_ptr.vmem [resolvable:$true] %s36
      %42 = dma.hbm_to_vmem [thread:$0]  %s3, 256, %s37, [#allocation3], 64, 64, 4
    $region17: #{tpu_custom_call.1} parent=1 // pred_fallthru
      _
    // Predicated region
    $region18: #{tpu_custom_call.1} parent=1 // pred_check
      _
    $region19: #{tpu_custom_call.1} parent=1 // pred_check_branch
      %44 = sbr.rel (0) target = $region21
    $region20: #{tpu_custom_call.1} parent=1 // pred_region
      _
    $region21: #{tpu_custom_call.1} parent=1 // pred_fallthru
      _
    // Predicated region
    $region22: #{tpu_custom_call.1} parent=1 // pred_check
      _
    $region23: #{tpu_custom_call.1} parent=1 // pred_check_branch
      %46 = sbr.rel (0) target = $region25
    $region24: #{tpu_custom_call.1} parent=1 // pred_region
      _
    $region25: #{tpu_custom_call.1} parent=1 // pred_fallthru
      _
    // Predicated region
    $region26: #{tpu_custom_call.1} parent=1 // pred_check
      _
    $region27: #{tpu_custom_call.1} parent=1 // pred_check_branch
      %48 = sbr.rel (0) target = $region29
    $region28: #{tpu_custom_call.1} parent=1 // pred_region
      %s50 = ssub.s32 256, 256
      %51 = vsyncadd [#allocation6], %s50
      %s52 = sshll.u32 [#allocation5], 4
      %s53 = int_to_ptr.vmem [resolvable:$true] %s52
      %58 = dma.hbm_to_vmem [thread:$0]  %s6, 256, %s53, [#allocation6], 64, 64, 4
    $region29: #{tpu_custom_call.1} parent=1 // pred_fallthru
      _
    // Predicated region
    $region30: #{tpu_custom_call.1} parent=1 // pred_check
      _
    $region31: #{tpu_custom_call.1} parent=1 // pred_check_branch
      %60 = sbr.rel (0) target = $region33
    $region32: #{tpu_custom_call.1} parent=1 // pred_region
      %s62 = ssub.s32 16, 16
      %63 = vsyncadd [#allocation6], %s62
      %s65 = sshll.u32 [#allocation7], 4
      %s66 = int_to_ptr.vmem [resolvable:$true] %s65
      %68 = dma.hbm_to_vmem [thread:$0]  %s7, 16, %s66, [#allocation6]
    $region33: #{tpu_custom_call.1} parent=1 // pred_fallthru
      _
    // Predicated region
    $region34: #{tpu_custom_call.1} parent=1 // pred_check
      _
    $region35: #{tpu_custom_call.1} parent=1 // pred_check_branch
      %70 = sbr.rel (0) target = $region37
    $region36: #{tpu_custom_call.1} parent=1 // pred_region
      _
    $region37: #{tpu_custom_call.1} parent=1 // pred_fallthru
      _
    // Predicated region
    $region38: #{tpu_custom_call.1} parent=1 // pred_check
      _
    $region39: #{tpu_custom_call.1} parent=1 // pred_check_branch
      %72 = sbr.rel (0) target = $region41
    $region40: #{tpu_custom_call.1} parent=1 // pred_region
      _
    $region41: #{tpu_custom_call.1} parent=1 // pred_fallthru
      _
    // Predicated region
    $region42: #{tpu_custom_call.1} parent=1 // pred_check
      _
    $region43: #{tpu_custom_call.1} parent=1 // pred_check_branch
      %74 = sbr.rel (0) target = $region45
    $region44: #{tpu_custom_call.1} parent=1 // pred_region
      _
    $region45: #{tpu_custom_call.1} parent=1 // pred_fallthru
      _
    // Predicated region
    $region46: #{tpu_custom_call.1} parent=1 // pred_check
      _
    $region47: #{tpu_custom_call.1} parent=1 // pred_check_branch
      %76 = sbr.rel (0) target = $region49
    $region48: #{tpu_custom_call.1} parent=1 // pred_region
      _
    $region49: #{tpu_custom_call.1} parent=1 // pred_fallthru
      _
    // Predicated region
    $region50: #{tpu_custom_call.1} parent=1 // pred_check
      _
    $region51: #{tpu_custom_call.1} parent=1 // pred_check_branch
      %78 = sbr.rel (0) target = $region53
    $region52: #{tpu_custom_call.1} parent=1 // pred_region
      _
    $region53: #{tpu_custom_call.1} parent=1 // pred_fallthru
      _
    // Predicated region
    $region54: #{tpu_custom_call.1} parent=1 // pred_check
      _
    $region55: #{tpu_custom_call.1} parent=1 // pred_check_branch
      %80 = sbr.rel (0) target = $region57
    $region56: #{tpu_custom_call.1} parent=1 // pred_region
      _
    $region57: #{tpu_custom_call.1} parent=1 // pred_fallthru
      _
    // Predicated region
    $region58: #{tpu_custom_call.1} parent=1 // pred_check
      _
    $region59: #{tpu_custom_call.1} parent=1 // pred_check_branch
      %82 = sbr.rel (0) target = $region61
    $region60: #{tpu_custom_call.1} parent=1 // pred_region
      %s84 = ssub.s32 2048, 2048
      %85 = vsyncadd [#allocation9], %s84
      %s86 = sshll.u32 [#allocation8], 4
      %s87 = int_to_ptr.vmem [resolvable:$true] %s86
      %92 = dma.hbm_to_vmem [thread:$0]  %s14, 2048, %s87, [#allocation9], 64, 64, 4
    $region61: #{tpu_custom_call.1} parent=1 // pred_fallthru
      _
    // Predicated region
    $region62: #{tpu_custom_call.1} parent=1 // pred_check
      _
    $region63: #{tpu_custom_call.1} parent=1 // pred_check_branch
      %94 = sbr.rel (0) target = $region65
    $region64: #{tpu_custom_call.1} parent=1 // pred_region
      _
    $region65: #{tpu_custom_call.1} parent=1 // pred_fallthru
      _
    // Predicated region
    $region66: #{tpu_custom_call.1} parent=1 // pred_check
      _
    $region67: #{tpu_custom_call.1} parent=1 // pred_check_branch
      %96 = sbr.rel (0) target = $region69
    $region68: #{tpu_custom_call.1} parent=1 // pred_region
      %97 = dma.done [#allocation3], 256
    $region69: #{tpu_custom_call.1} parent=1 // pred_fallthru
      _
    // Predicated region
    $region70: #{tpu_custom_call.1} parent=1 // pred_check
      _
    $region71: #{tpu_custom_call.1} parent=1 // pred_check_branch
      %99 = sbr.rel (0) target = $region73
    $region72: #{tpu_custom_call.1} parent=1 // pred_region
      %100 = dma.done [#allocation6], 256
    $region73: #{tpu_custom_call.1} parent=1 // pred_fallthru
      _
    // Predicated region
    $region74: #{tpu_custom_call.1} parent=1 // pred_check
      _
    $region75: #{tpu_custom_call.1} parent=1 // pred_check_branch
      %102 = sbr.rel (0) target = $region77
    $region76: #{tpu_custom_call.1} parent=1 // pred_region
      %103 = dma.done [#allocation6], 16
    $region77: #{tpu_custom_call.1} parent=1 // pred_fallthru
      _
    // Predicated region
    $region78: #{tpu_custom_call.1} parent=1 // pred_check
      _
    $region79: #{tpu_custom_call.1} parent=1 // pred_check_branch
      %105 = sbr.rel (0) target = $region81
    $region80: #{tpu_custom_call.1} parent=1 // pred_region
      %106 = dma.done [#allocation9], 2048
    $region81: #{tpu_custom_call.1} parent=1 // pred_fallthru
      _
    %v108 = vld [vmem:[%s0] sm:$0xf]
    %v109 = vld [vmem:[%s0 + $0x4] sm:$0xf]
    %v110 = vunpack.c.l.bf16 %v108
    %v111 = vunpack.c.l.bf16 %v109
    %v112 = vld [vmem:[%s1] sm:$0x1]
    %v113 = vld [vmem:[%s1 + $0x1] sm:$0x1]
    %vm114 = vcmp.gt.f32.partialorder %v112, 0.0
    %vm115 = vcmp.gt.f32.partialorder %v113, 0.0
    %v116 = vsel %vm114, 0.0, -1e+09
    %v117 = vsel %vm115, 0.0, -1e+09
    %v118 = vld [vmem:[%s2] sm:$0xf]
    %v119 = vld [vmem:[%s2 + $0x4] sm:$0xf]
    %v120 = vld [vmem:[%s2 + $0x8] sm:$0xf]
    %v121 = vld [vmem:[%s2 + $0xc] sm:$0xf]
    %v124 = vunpack.c.l.b16 %v108
    %v125 = vunpack.c.l.b16 %v109
    %v126 = vpack.c.b16 %v125, %v124
    %v131 = vunpack.c.l.b16 %v118
    %v132 = vunpack.c.l.b16 %v119
    %v133 = vunpack.c.l.b16 %v120
    %v134 = vunpack.c.l.b16 %v121
    %v135 = vpack.c.b16 %v132, %v131
    %v136 = vpack.c.b16 %v134, %v133
    %vm139 = vcmask 261120
    %v141 = vsel %vm139, %v126, 0
    %143 = vmatprep.subr.bf16.mxu0 0
    %144 = vmatpush1.bf16.msra.mxu0 %v135
    %145 = vmatprep.subr.bf16.mxu0 0
    %146 = vmatpush1.bf16.msra.mxu0 %v136
    %147 = vmatprep.subr.bf16.mxu0 0
    %148 = vmatpush1.bf16.msra.mxu0 0
    %149 = vmatprep.subr.bf16.mxu0 0
    %150 = vmatpush1.bf16.msra.mxu0 0
    %151 = vmatprep.subr.bf16.mxu0 0
    %152 = vmatpush1.bf16.msra.mxu0 0
    %153 = vmatprep.subr.bf16.mxu0 0
    %154 = vmatpush1.bf16.msra.mxu0 0
    %155 = vmatprep.subr.bf16.mxu0 0
    %156 = vmatpush1.bf16.msra.mxu0 0
    %157 = vmatprep.subr.bf16.mxu0 0
    %158 = vmatpush1.bf16.msra.mxu0 0
    %159 = vmatprep.subr.bf16.mxu0 0
    %160 = vmatpush1.bf16.msra.mxu0 0
    %161 = vmatprep.subr.bf16.mxu0 0
    %162 = vmatpush1.bf16.msra.mxu0 0
    %163 = vmatprep.subr.bf16.mxu0 0
    %164 = vmatpush1.bf16.msra.mxu0 0
    %165 = vmatprep.subr.bf16.mxu0 0
    %166 = vmatpush1.bf16.msra.mxu0 0
    %167 = vmatprep.subr.bf16.mxu0 0
    %168 = vmatpush1.bf16.msra.mxu0 0
    %169 = vmatprep.subr.bf16.mxu0 0
    %170 = vmatpush1.bf16.msra.mxu0 0
    %171 = vmatprep.subr.bf16.mxu0 0
    %172 = vmatpush1.bf16.msra.mxu0 0
    %173 = vmatprep.subr.bf16.mxu0 0
    %174 = vmatpush1.bf16.msra.mxu0 0
    %175 = vmatprep.mubr.bf16.mxu0 0
    %176 = vmatmul.mubr.bf16.gmra.mrb[0].mxu0 %v141
    %v177 = vpop.f32.mrb[0].mxu0
    %v178 = vadd.f32 0.0, %v177
    %v179 = vpop.f32.mrb[0].mxu0
    %v180 = vpop.f32.mrb[0].mxu0
    %v181 = vadd.f32 0.0, %v180
    %v182 = vpop.f32.mrb[0].mxu0
    %183 = vdwg.mxu0
    %v184 = vpack.c.bf16 %v178, %v178
    %v185 = vpack.c.bf16 %v181, %v181
    %187 = vrot.lane.b32.xlu0 %v184, 96
    %v188 = vpop.permute.xlu0 %187
    %vm189 = vcmask 64512
    %v191 = vsel %vm189, %v184, 0
    %v194 = vsel %vm189, %v188, 0
    %196 = vmatprep.subr.bf16.mxu0 0
    %197 = vmatpush1.bf16.xpose.msra.mxu0 %v194
    %198 = vmatprep.subr.bf16.mxu0 0
    %199 = vmatpush1.bf16.xpose.msra.mxu0 0
    %200 = vmatprep.subr.bf16.mxu0 0
    %201 = vmatpush1.bf16.xpose.msra.mxu0 0
    %202 = vmatprep.subr.bf16.mxu0 0
    %203 = vmatpush1.bf16.xpose.msra.mxu0 0
    %204 = vmatprep.subr.bf16.mxu0 0
    %205 = vmatpush1.bf16.xpose.msra.mxu0 0
    %206 = vmatprep.subr.bf16.mxu0 0
    %207 = vmatpush1.bf16.xpose.msra.mxu0 0
    %208 = vmatprep.subr.bf16.mxu0 0
    %209 = vmatpush1.bf16.xpose.msra.mxu0 0
    %210 = vmatprep.subr.bf16.mxu0 0
    %211 = vmatpush1.bf16.xpose.msra.mxu0 0
    %212 = vmatprep.subr.bf16.mxu0 0
    %213 = vmatpush1.bf16.xpose.msra.mxu0 0
    %214 = vmatprep.subr.bf16.mxu0 0
    %215 = vmatpush1.bf16.xpose.msra.mxu0 0
    %216 = vmatprep.subr.bf16.mxu0 0
    %217 = vmatpush1.bf16.xpose.msra.mxu0 0
    %218 = vmatprep.subr.bf16.mxu0 0
    %219 = vmatpush1.bf16.xpose.msra.mxu0 0
    %220 = vmatprep.subr.bf16.mxu0 0
    %221 = vmatpush1.bf16.xpose.msra.mxu0 0
    %222 = vmatprep.subr.bf16.mxu0 0
    %223 = vmatpush1.bf16.xpose.msra.mxu0 0
    %224 = vmatprep.subr.bf16.mxu0 0
    %225 = vmatpush1.bf16.xpose.msra.mxu0 0
    %226 = vmatprep.subr.bf16.mxu0 0
    %227 = vmatpush1.bf16.xpose.msra.mxu0 0
    %228 = vmatprep.mubr.bf16.mxu0 0
    %229 = vmatmul.mubr.bf16.gmra.mrb[0].mxu0 %v191
    %v230 = vpop.f32.mrb[0].mxu0
    %v231 = vadd.f32 0.0, %v230
    %v232 = vpop.f32.mrb[0].mxu0
    %v233 = vpop.f32.mrb[0].mxu0
    %v234 = vpop.f32.mrb[0].mxu0
    %235 = vdwg.mxu0
    %237 = vrot.lane.b32.xlu0 %v185, 96
    %v238 = vpop.permute.xlu0 %237
    %v240 = vsel %vm189, %v185, 0
    %v243 = vsel %vm189, %v238, 0
    %245 = vmatprep.subr.bf16.mxu0 0
    %246 = vmatpush1.bf16.xpose.msra.mxu0 %v243
    %247 = vmatprep.subr.bf16.mxu0 0
    %248 = vmatpush1.bf16.xpose.msra.mxu0 0
    %249 = vmatprep.subr.bf16.mxu0 0
    %250 = vmatpush1.bf16.xpose.msra.mxu0 0
    %251 = vmatprep.subr.bf16.mxu0 0
    %252 = vmatpush1.bf16.xpose.msra.mxu0 0
    %253 = vmatprep.subr.bf16.mxu0 0
    %254 = vmatpush1.bf16.xpose.msra.mxu0 0
    %255 = vmatprep.subr.bf16.mxu0 0
    %256 = vmatpush1.bf16.xpose.msra.mxu0 0
    %257 = vmatprep.subr.bf16.mxu0 0
    %258 = vmatpush1.bf16.xpose.msra.mxu0 0
    %259 = vmatprep.subr.bf16.mxu0 0
    %260 = vmatpush1.bf16.xpose.msra.mxu0 0
    %261 = vmatprep.subr.bf16.mxu0 0
    %262 = vmatpush1.bf16.xpose.msra.mxu0 0
    %263 = vmatprep.subr.bf16.mxu0 0
    %264 = vmatpush1.bf16.xpose.msra.mxu0 0
    %265 = vmatprep.subr.bf16.mxu0 0
    %266 = vmatpush1.bf16.xpose.msra.mxu0 0
    %267 = vmatprep.subr.bf16.mxu0 0
    %268 = vmatpush1.bf16.xpose.msra.mxu0 0
    %269 = vmatprep.subr.bf16.mxu0 0
    %270 = vmatpush1.bf16.xpose.msra.mxu0 0
    %271 = vmatprep.subr.bf16.mxu0 0
    %272 = vmatpush1.bf16.xpose.msra.mxu0 0
    %273 = vmatprep.subr.bf16.mxu0 0
    %274 = vmatpush1.bf16.xpose.msra.mxu0 0
    %275 = vmatprep.subr.bf16.mxu0 0
    %276 = vmatpush1.bf16.xpose.msra.mxu0 0
    %277 = vmatprep.mubr.bf16.mxu0 0
    %278 = vmatmul.mubr.bf16.gmra.mrb[0].mxu0 %v240
    %v279 = vpop.f32.mrb[0].mxu0
    %v280 = vadd.f32 0.0, %v279
    %v281 = vpop.f32.mrb[0].mxu0
    %v282 = vpop.f32.mrb[0].mxu0
    %v283 = vpop.f32.mrb[0].mxu0
    %284 = vdwg.mxu0
    %v285 = vmul.f32 %v231, 0.35355338
    %v286 = vmul.f32 %v280, 0.35355338
    %v289 = vlaneseq
    %v290 = vshrl.u32 %v289, 7
    %v291 = vsub.s32 0, %v290
    %v292 = vrot.slane %v116, %v291
    %v293 = vlaneseq
    %v294 = vshrl.u32 %v293, 7
    %v295 = vsub.s32 0, %v294
    %v296 = vrot.slane %v117, %v295
    %v299 = vadd.f32 %v285, %v292
    %v300 = vadd.f32 %v286, %v296
    %v301 = vsel %vm189, %v299, -inf
    %302 = vmax.xlane.f32.xlu0 %v301
    %v303 = vpop.xlane.xlu0 %302
    %v304 = vsel %vm189, %v300, -inf
    %305 = vmax.xlane.f32.xlu0 %v304
    %v306 = vpop.xlane.xlu0 %305
    %v307 = vsub.f32 %v299, %v303
    %v308 = vsub.f32 %v300, %v306
    %v309 = vmul.f32 %v307, 1.442695
    %v310 = vpow.pop %v309
    %v311 = vmul.f32 %v308, 1.442695
    %v312 = vpow.pop %v311
    %v313 = vsel %vm189, %v310, 0.0
    %314 = vadd.xlane.f32.xlu0 %v313
    %v315 = vpop.xlane.xlu0 %314
    %v316 = vsel %vm189, %v312, 0.0
    %317 = vadd.xlane.f32.xlu0 %v316
    %v318 = vpop.xlane.xlu0 %317
    %v319 = vpack.c.bf16 %v310, %v310
    %v320 = vpack.c.bf16 %v312, %v312
    %321 = vrot.lane.b32.xlu0 %v184, 64
    %v322 = vpop.permute.xlu0 %321
    %v324 = vsel %vm189, %v319, 0
    %vm326 = vcmask 1043456
    %v328 = vsel %vm326, %v322, 0
    %330 = vmatprep.subr.bf16.mxu0 0
    %331 = vmatpush1.bf16.msra.mxu0 %v328
    %332 = vmatprep.subr.bf16.mxu0 0
    %333 = vmatpush1.bf16.msra.mxu0 0
    %334 = vmatprep.subr.bf16.mxu0 0
    %335 = vmatpush1.bf16.msra.mxu0 0
    %336 = vmatprep.subr.bf16.mxu0 0
    %337 = vmatpush1.bf16.msra.mxu0 0
    %338 = vmatprep.subr.bf16.mxu0 0
    %339 = vmatpush1.bf16.msra.mxu0 0
    %340 = vmatprep.subr.bf16.mxu0 0
    %341 = vmatpush1.bf16.msra.mxu0 0
    %342 = vmatprep.subr.bf16.mxu0 0
    %343 = vmatpush1.bf16.msra.mxu0 0
    %344 = vmatprep.subr.bf16.mxu0 0
    %345 = vmatpush1.bf16.msra.mxu0 0
    %346 = vmatprep.subr.bf16.mxu0 0
    %347 = vmatpush1.bf16.msra.mxu0 0
    %348 = vmatprep.subr.bf16.mxu0 0
    %349 = vmatpush1.bf16.msra.mxu0 0
    %350 = vmatprep.subr.bf16.mxu0 0
    %351 = vmatpush1.bf16.msra.mxu0 0
    %352 = vmatprep.subr.bf16.mxu0 0
    %353 = vmatpush1.bf16.msra.mxu0 0
    %354 = vmatprep.subr.bf16.mxu0 0
    %355 = vmatpush1.bf16.msra.mxu0 0
    %356 = vmatprep.subr.bf16.mxu0 0
    %357 = vmatpush1.bf16.msra.mxu0 0
    %358 = vmatprep.subr.bf16.mxu0 0
    %359 = vmatpush1.bf16.msra.mxu0 0
    %360 = vmatprep.subr.bf16.mxu0 0
    %361 = vmatpush1.bf16.msra.mxu0 0
    %362 = vmatprep.mubr.bf16.mxu0 0
    %363 = vmatmul.mubr.bf16.gmra.mrb[0].mxu0 %v324
    %v364 = vpop.f32.mrb[0].mxu0
    %v365 = vadd.f32 0.0, %v364
    %v366 = vpop.f32.mrb[0].mxu0
    %v367 = vpop.f32.mrb[0].mxu0
    %v368 = vpop.f32.mrb[0].mxu0
    %369 = vdwg.mxu0
    %370 = vrot.lane.b32.xlu0 %v185, 64
    %v371 = vpop.permute.xlu0 %370
    %v373 = vsel %vm189, %v320, 0
    %v376 = vsel %vm326, %v371, 0
    %378 = vmatprep.subr.bf16.mxu0 0
    %379 = vmatpush1.bf16.msra.mxu0 %v376
    %380 = vmatprep.subr.bf16.mxu0 0
    %381 = vmatpush1.bf16.msra.mxu0 0
    %382 = vmatprep.subr.bf16.mxu0 0
    %383 = vmatpush1.bf16.msra.mxu0 0
    %384 = vmatprep.subr.bf16.mxu0 0
    %385 = vmatpush1.bf16.msra.mxu0 0
    %386 = vmatprep.subr.bf16.mxu0 0
    %387 = vmatpush1.bf16.msra.mxu0 0
    %388 = vmatprep.subr.bf16.mxu0 0
    %389 = vmatpush1.bf16.msra.mxu0 0
    %390 = vmatprep.subr.bf16.mxu0 0
    %391 = vmatpush1.bf16.msra.mxu0 0
    %392 = vmatprep.subr.bf16.mxu0 0
    %393 = vmatpush1.bf16.msra.mxu0 0
    %394 = vmatprep.subr.bf16.mxu0 0
    %395 = vmatpush1.bf16.msra.mxu0 0
    %396 = vmatprep.subr.bf16.mxu0 0
    %397 = vmatpush1.bf16.msra.mxu0 0
    %398 = vmatprep.subr.bf16.mxu0 0
    %399 = vmatpush1.bf16.msra.mxu0 0
    %400 = vmatprep.subr.bf16.mxu0 0
    %401 = vmatpush1.bf16.msra.mxu0 0
    %402 = vmatprep.subr.bf16.mxu0 0
    %403 = vmatpush1.bf16.msra.mxu0 0
    %404 = vmatprep.subr.bf16.mxu0 0
    %405 = vmatpush1.bf16.msra.mxu0 0
    %406 = vmatprep.subr.bf16.mxu0 0
    %407 = vmatpush1.bf16.msra.mxu0 0
    %408 = vmatprep.subr.bf16.mxu0 0
    %409 = vmatpush1.bf16.msra.mxu0 0
    %410 = vmatprep.mubr.bf16.mxu0 0
    %411 = vmatmul.mubr.bf16.gmra.mrb[0].mxu0 %v373
    %v412 = vpop.f32.mrb[0].mxu0
    %v413 = vadd.f32 0.0, %v412
    %v414 = vpop.f32.mrb[0].mxu0
    %v415 = vpop.f32.mrb[0].mxu0
    %v416 = vpop.f32.mrb[0].mxu0
    %417 = vdwg.mxu0
    %v418 = vrcp.pop %v315
    %v419 = vrcp.pop %v318
    %v420 = vmul.f32 %v365, %v418
    %v421 = vmul.f32 %v413, %v419
    %v422 = vpack.c.bf16 %v420, %v420
    %v423 = vpack.c.bf16 %v421, %v421
    %424 = vrot.lane.b32.xlu0 %v184, 120
    %v425 = vpop.permute.xlu0 %424
    %426 = vrot.lane.b32.xlu0 %v184, 88
    %v427 = vpop.permute.xlu0 %426
    %v429 = vsel %vm189, %v425, 0
    %v432 = vsel %vm189, %v427, 0
    %434 = vmatprep.subr.bf16.mxu0 0
    %435 = vmatpush1.bf16.xpose.msra.mxu0 %v432
    %436 = vmatprep.subr.bf16.mxu0 0
    %437 = vmatpush1.bf16.xpose.msra.mxu0 0
    %438 = vmatprep.subr.bf16.mxu0 0
    %439 = vmatpush1.bf16.xpose.msra.mxu0 0
    %440 = vmatprep.subr.bf16.mxu0 0
    %441 = vmatpush1.bf16.xpose.msra.mxu0 0
    %442 = vmatprep.subr.bf16.mxu0 0
    %443 = vmatpush1.bf16.xpose.msra.mxu0 0
    %444 = vmatprep.subr.bf16.mxu0 0
    %445 = vmatpush1.bf16.xpose.msra.mxu0 0
    %446 = vmatprep.subr.bf16.mxu0 0
    %447 = vmatpush1.bf16.xpose.msra.mxu0 0
    %448 = vmatprep.subr.bf16.mxu0 0
    %449 = vmatpush1.bf16.xpose.msra.mxu0 0
    %450 = vmatprep.subr.bf16.mxu0 0
    %451 = vmatpush1.bf16.xpose.msra.mxu0 0
    %452 = vmatprep.subr.bf16.mxu0 0
    %453 = vmatpush1.bf16.xpose.msra.mxu0 0
    %454 = vmatprep.subr.bf16.mxu0 0
    %455 = vmatpush1.bf16.xpose.msra.mxu0 0
    %456 = vmatprep.subr.bf16.mxu0 0
    %457 = vmatpush1.bf16.xpose.msra.mxu0 0
    %458 = vmatprep.subr.bf16.mxu0 0
    %459 = vmatpush1.bf16.xpose.msra.mxu0 0
    %460 = vmatprep.subr.bf16.mxu0 0
    %461 = vmatpush1.bf16.xpose.msra.mxu0 0
    %462 = vmatprep.subr.bf16.mxu0 0
    %463 = vmatpush1.bf16.xpose.msra.mxu0 0
    %464 = vmatprep.subr.bf16.mxu0 0
    %465 = vmatpush1.bf16.xpose.msra.mxu0 0
    %466 = vmatprep.mubr.bf16.mxu0 0
    %467 = vmatmul.mubr.bf16.gmra.mrb[0].mxu0 %v429
    %v468 = vpop.f32.mrb[0].mxu0
    %v469 = vadd.f32 0.0, %v468
    %v470 = vpop.f32.mrb[0].mxu0
    %v471 = vpop.f32.mrb[0].mxu0
    %v472 = vpop.f32.mrb[0].mxu0
    %473 = vdwg.mxu0
    %474 = vrot.lane.b32.xlu0 %v185, 120
    %v475 = vpop.permute.xlu0 %474
    %476 = vrot.lane.b32.xlu0 %v185, 88
    %v477 = vpop.permute.xlu0 %476
    %v479 = vsel %vm189, %v475, 0
    %v482 = vsel %vm189, %v477, 0
    %484 = vmatprep.subr.bf16.mxu0 0
    %485 = vmatpush1.bf16.xpose.msra.mxu0 %v482
    %486 = vmatprep.subr.bf16.mxu0 0
    %487 = vmatpush1.bf16.xpose.msra.mxu0 0
    %488 = vmatprep.subr.bf16.mxu0 0
    %489 = vmatpush1.bf16.xpose.msra.mxu0 0
    %490 = vmatprep.subr.bf16.mxu0 0
    %491 = vmatpush1.bf16.xpose.msra.mxu0 0
    %492 = vmatprep.subr.bf16.mxu0 0
    %493 = vmatpush1.bf16.xpose.msra.mxu0 0
    %494 = vmatprep.subr.bf16.mxu0 0
    %495 = vmatpush1.bf16.xpose.msra.mxu0 0
    %496 = vmatprep.subr.bf16.mxu0 0
    %497 = vmatpush1.bf16.xpose.msra.mxu0 0
    %498 = vmatprep.subr.bf16.mxu0 0
    %499 = vmatpush1.bf16.xpose.msra.mxu0 0
    %500 = vmatprep.subr.bf16.mxu0 0
    %501 = vmatpush1.bf16.xpose.msra.mxu0 0
    %502 = vmatprep.subr.bf16.mxu0 0
    %503 = vmatpush1.bf16.xpose.msra.mxu0 0
    %504 = vmatprep.subr.bf16.mxu0 0
    %505 = vmatpush1.bf16.xpose.msra.mxu0 0
    %506 = vmatprep.subr.bf16.mxu0 0
    %507 = vmatpush1.bf16.xpose.msra.mxu0 0
    %508 = vmatprep.subr.bf16.mxu0 0
    %509 = vmatpush1.bf16.xpose.msra.mxu0 0
    %510 = vmatprep.subr.bf16.mxu0 0
    %511 = vmatpush1.bf16.xpose.msra.mxu0 0
    %512 = vmatprep.subr.bf16.mxu0 0
    %513 = vmatpush1.bf16.xpose.msra.mxu0 0
    %514 = vmatprep.subr.bf16.mxu0 0
    %515 = vmatpush1.bf16.xpose.msra.mxu0 0
    %516 = vmatprep.mubr.bf16.mxu0 0
    %517 = vmatmul.mubr.bf16.gmra.mrb[0].mxu0 %v479
    %v518 = vpop.f32.mrb[0].mxu0
    %v519 = vadd.f32 0.0, %v518
    %v520 = vpop.f32.mrb[0].mxu0
    %v521 = vpop.f32.mrb[0].mxu0
    %v522 = vpop.f32.mrb[0].mxu0
    %523 = vdwg.mxu0
    %v524 = vmul.f32 %v469, 0.35355338
    %v525 = vmul.f32 %v519, 0.35355338
    %v526 = vadd.f32 %v524, %v292
    %v527 = vadd.f32 %v525, %v296
    %v528 = vsel %vm189, %v526, -inf
    %529 = vmax.xlane.f32.xlu0 %v528
    %v530 = vpop.xlane.xlu0 %529
    %v531 = vsel %vm189, %v527, -inf
    %532 = vmax.xlane.f32.xlu0 %v531
    %v533 = vpop.xlane.xlu0 %532
    %v534 = vsub.f32 %v526, %v530
    %v535 = vsub.f32 %v527, %v533
    %v536 = vmul.f32 %v534, 1.442695
    %v537 = vpow.pop %v536
    %v538 = vmul.f32 %v535, 1.442695
    %v539 = vpow.pop %v538
    %v540 = vsel %vm189, %v537, 0.0
    %541 = vadd.xlane.f32.xlu0 %v540
    %v542 = vpop.xlane.xlu0 %541
    %v543 = vsel %vm189, %v539, 0.0
    %544 = vadd.xlane.f32.xlu0 %v543
    %v545 = vpop.xlane.xlu0 %544
    %v546 = vpack.c.bf16 %v537, %v537
    %v547 = vpack.c.bf16 %v539, %v539
    %548 = vrot.lane.b32.xlu0 %v184, 56
    %v549 = vpop.permute.xlu0 %548
    %v551 = vsel %vm189, %v546, 0
    %v554 = vsel %vm326, %v549, 0
    %556 = vmatprep.subr.bf16.mxu0 0
    %557 = vmatpush1.bf16.msra.mxu0 %v554
    %558 = vmatprep.subr.bf16.mxu0 0
    %559 = vmatpush1.bf16.msra.mxu0 0
    %560 = vmatprep.subr.bf16.mxu0 0
    %561 = vmatpush1.bf16.msra.mxu0 0
    %562 = vmatprep.subr.bf16.mxu0 0
    %563 = vmatpush1.bf16.msra.mxu0 0
    %564 = vmatprep.subr.bf16.mxu0 0
    %565 = vmatpush1.bf16.msra.mxu0 0
    %566 = vmatprep.subr.bf16.mxu0 0
    %567 = vmatpush1.bf16.msra.mxu0 0
    %568 = vmatprep.subr.bf16.mxu0 0
    %569 = vmatpush1.bf16.msra.mxu0 0
    %570 = vmatprep.subr.bf16.mxu0 0
    %571 = vmatpush1.bf16.msra.mxu0 0
    %572 = vmatprep.subr.bf16.mxu0 0
    %573 = vmatpush1.bf16.msra.mxu0 0
    %574 = vmatprep.subr.bf16.mxu0 0
    %575 = vmatpush1.bf16.msra.mxu0 0
    %576 = vmatprep.subr.bf16.mxu0 0
    %577 = vmatpush1.bf16.msra.mxu0 0
    %578 = vmatprep.subr.bf16.mxu0 0
    %579 = vmatpush1.bf16.msra.mxu0 0
    %580 = vmatprep.subr.bf16.mxu0 0
    %581 = vmatpush1.bf16.msra.mxu0 0
    %582 = vmatprep.subr.bf16.mxu0 0
    %583 = vmatpush1.bf16.msra.mxu0 0
    %584 = vmatprep.subr.bf16.mxu0 0
    %585 = vmatpush1.bf16.msra.mxu0 0
    %586 = vmatprep.subr.bf16.mxu0 0
    %587 = vmatpush1.bf16.msra.mxu0 0
    %588 = vmatprep.mubr.bf16.mxu0 0
    %589 = vmatmul.mubr.bf16.gmra.mrb[0].mxu0 %v551
    %v590 = vpop.f32.mrb[0].mxu0
    %v591 = vadd.f32 0.0, %v590
    %v592 = vpop.f32.mrb[0].mxu0
    %v593 = vpop.f32.mrb[0].mxu0
    %v594 = vpop.f32.mrb[0].mxu0
    %595 = vdwg.mxu0
    %596 = vrot.lane.b32.xlu0 %v185, 56
    %v597 = vpop.permute.xlu0 %596
    %v599 = vsel %vm189, %v547, 0
    %v602 = vsel %vm326, %v597, 0
    %604 = vmatprep.subr.bf16.mxu0 0
    %605 = vmatpush1.bf16.msra.mxu0 %v602
    %606 = vmatprep.subr.bf16.mxu0 0
    %607 = vmatpush1.bf16.msra.mxu0 0
    %608 = vmatprep.subr.bf16.mxu0 0
    %609 = vmatpush1.bf16.msra.mxu0 0
    %610 = vmatprep.subr.bf16.mxu0 0
    %611 = vmatpush1.bf16.msra.mxu0 0
    %612 = vmatprep.subr.bf16.mxu0 0
    %613 = vmatpush1.bf16.msra.mxu0 0
    %614 = vmatprep.subr.bf16.mxu0 0
    %615 = vmatpush1.bf16.msra.mxu0 0
    %616 = vmatprep.subr.bf16.mxu0 0
    %617 = vmatpush1.bf16.msra.mxu0 0
    %618 = vmatprep.subr.bf16.mxu0 0
    %619 = vmatpush1.bf16.msra.mxu0 0
    %620 = vmatprep.subr.bf16.mxu0 0
    %621 = vmatpush1.bf16.msra.mxu0 0
    %622 = vmatprep.subr.bf16.mxu0 0
    %623 = vmatpush1.bf16.msra.mxu0 0
    %624 = vmatprep.subr.bf16.mxu0 0
    %625 = vmatpush1.bf16.msra.mxu0 0
    %626 = vmatprep.subr.bf16.mxu0 0
    %627 = vmatpush1.bf16.msra.mxu0 0
    %628 = vmatprep.subr.bf16.mxu0 0
    %629 = vmatpush1.bf16.msra.mxu0 0
    %630 = vmatprep.subr.bf16.mxu0 0
    %631 = vmatpush1.bf16.msra.mxu0 0
    %632 = vmatprep.subr.bf16.mxu0 0
    %633 = vmatpush1.bf16.msra.mxu0 0
    %634 = vmatprep.subr.bf16.mxu0 0
    %635 = vmatpush1.bf16.msra.mxu0 0
    %636 = vmatprep.mubr.bf16.mxu0 0
    %637 = vmatmul.mubr.bf16.gmra.mrb[0].mxu0 %v599
    %v638 = vpop.f32.mrb[0].mxu0
    %v639 = vadd.f32 0.0, %v638
    %v640 = vpop.f32.mrb[0].mxu0
    %v641 = vpop.f32.mrb[0].mxu0
    %v642 = vpop.f32.mrb[0].mxu0
    %643 = vdwg.mxu0
    %v644 = vrcp.pop %v542
    %v645 = vrcp.pop %v545
    %v646 = vmul.f32 %v591, %v644
    %v647 = vmul.f32 %v639, %v645
    %v648 = vpack.c.bf16 %v646, %v646
    %v649 = vpack.c.bf16 %v647, %v647
    %650 = vrot.lane.b32.xlu0 %v184, 112
    %v651 = vpop.permute.xlu0 %650
    %652 = vrot.lane.b32.xlu0 %v184, 80
    %v653 = vpop.permute.xlu0 %652
    %v655 = vsel %vm189, %v651, 0
    %v658 = vsel %vm189, %v653, 0
    %660 = vmatprep.subr.bf16.mxu0 0
    %661 = vmatpush1.bf16.xpose.msra.mxu0 %v658
    %662 = vmatprep.subr.bf16.mxu0 0
    %663 = vmatpush1.bf16.xpose.msra.mxu0 0
    %664 = vmatprep.subr.bf16.mxu0 0
    %665 = vmatpush1.bf16.xpose.msra.mxu0 0
    %666 = vmatprep.subr.bf16.mxu0 0
    %667 = vmatpush1.bf16.xpose.msra.mxu0 0
    %668 = vmatprep.subr.bf16.mxu0 0
    %669 = vmatpush1.bf16.xpose.msra.mxu0 0
    %670 = vmatprep.subr.bf16.mxu0 0
    %671 = vmatpush1.bf16.xpose.msra.mxu0 0
    %672 = vmatprep.subr.bf16.mxu0 0
    %673 = vmatpush1.bf16.xpose.msra.mxu0 0
    %674 = vmatprep.subr.bf16.mxu0 0
    %675 = vmatpush1.bf16.xpose.msra.mxu0 0
    %676 = vmatprep.subr.bf16.mxu0 0
    %677 = vmatpush1.bf16.xpose.msra.mxu0 0
    %678 = vmatprep.subr.bf16.mxu0 0
    %679 = vmatpush1.bf16.xpose.msra.mxu0 0
    %680 = vmatprep.subr.bf16.mxu0 0
    %681 = vmatpush1.bf16.xpose.msra.mxu0 0
    %682 = vmatprep.subr.bf16.mxu0 0
    %683 = vmatpush1.bf16.xpose.msra.mxu0 0
    %684 = vmatprep.subr.bf16.mxu0 0
    %685 = vmatpush1.bf16.xpose.msra.mxu0 0
    %686 = vmatprep.subr.bf16.mxu0 0
    %687 = vmatpush1.bf16.xpose.msra.mxu0 0
    %688 = vmatprep.subr.bf16.mxu0 0
    %689 = vmatpush1.bf16.xpose.msra.mxu0 0
    %690 = vmatprep.subr.bf16.mxu0 0
    %691 = vmatpush1.bf16.xpose.msra.mxu0 0
    %692 = vmatprep.mubr.bf16.mxu0 0
    %693 = vmatmul.mubr.bf16.gmra.mrb[0].mxu0 %v655
    %v694 = vpop.f32.mrb[0].mxu0
    %v695 = vadd.f32 0.0, %v694
    %v696 = vpop.f32.mrb[0].mxu0
    %v697 = vpop.f32.mrb[0].mxu0
    %v698 = vpop.f32.mrb[0].mxu0
    %699 = vdwg.mxu0
    %700 = vrot.lane.b32.xlu0 %v185, 112
    %v701 = vpop.permute.xlu0 %700
    %702 = vrot.lane.b32.xlu0 %v185, 80
    %v703 = vpop.permute.xlu0 %702
    %v705 = vsel %vm189, %v701, 0
    %v708 = vsel %vm189, %v703, 0
    %710 = vmatprep.subr.bf16.mxu0 0
    %711 = vmatpush1.bf16.xpose.msra.mxu0 %v708
    %712 = vmatprep.subr.bf16.mxu0 0
    %713 = vmatpush1.bf16.xpose.msra.mxu0 0
    %714 = vmatprep.subr.bf16.mxu0 0
    %715 = vmatpush1.bf16.xpose.msra.mxu0 0
    %716 = vmatprep.subr.bf16.mxu0 0
    %717 = vmatpush1.bf16.xpose.msra.mxu0 0
    %718 = vmatprep.subr.bf16.mxu0 0
    %719 = vmatpush1.bf16.xpose.msra.mxu0 0
    %720 = vmatprep.subr.bf16.mxu0 0
    %721 = vmatpush1.bf16.xpose.msra.mxu0 0
    %722 = vmatprep.subr.bf16.mxu0 0
    %723 = vmatpush1.bf16.xpose.msra.mxu0 0
    %724 = vmatprep.subr.bf16.mxu0 0
    %725 = vmatpush1.bf16.xpose.msra.mxu0 0
    %726 = vmatprep.subr.bf16.mxu0 0
    %727 = vmatpush1.bf16.xpose.msra.mxu0 0
    %728 = vmatprep.subr.bf16.mxu0 0
    %729 = vmatpush1.bf16.xpose.msra.mxu0 0
    %730 = vmatprep.subr.bf16.mxu0 0
    %731 = vmatpush1.bf16.xpose.msra.mxu0 0
    %732 = vmatprep.subr.bf16.mxu0 0
    %733 = vmatpush1.bf16.xpose.msra.mxu0 0
    %734 = vmatprep.subr.bf16.mxu0 0
    %735 = vmatpush1.bf16.xpose.msra.mxu0 0
    %736 = vmatprep.subr.bf16.mxu0 0
    %737 = vmatpush1.bf16.xpose.msra.mxu0 0
    %738 = vmatprep.subr.bf16.mxu0 0
    %739 = vmatpush1.bf16.xpose.msra.mxu0 0
    %740 = vmatprep.subr.bf16.mxu0 0
    %741 = vmatpush1.bf16.xpose.msra.mxu0 0
    %742 = vmatprep.mubr.bf16.mxu0 0
    %743 = vmatmul.mubr.bf16.gmra.mrb[0].mxu0 %v705
    %v744 = vpop.f32.mrb[0].mxu0
    %v745 = vadd.f32 0.0, %v744
    %v746 = vpop.f32.mrb[0].mxu0
    %v747 = vpop.f32.mrb[0].mxu0
    %v748 = vpop.f32.mrb[0].mxu0
    %749 = vdwg.mxu0
    %v750 = vmul.f32 %v695, 0.35355338
    %v751 = vmul.f32 %v745, 0.35355338
    %v752 = vadd.f32 %v750, %v292
    %v753 = vadd.f32 %v751, %v296
    %v754 = vsel %vm189, %v752, -inf
    %755 = vmax.xlane.f32.xlu0 %v754
    %v756 = vpop.xlane.xlu0 %755
    %v757 = vsel %vm189, %v753, -inf
    %758 = vmax.xlane.f32.xlu0 %v757
    %v759 = vpop.xlane.xlu0 %758
    %v760 = vsub.f32 %v752, %v756
    %v761 = vsub.f32 %v753, %v759
    %v762 = vmul.f32 %v760, 1.442695
    %v763 = vpow.pop %v762
    %v764 = vmul.f32 %v761, 1.442695
    %v765 = vpow.pop %v764
    %v766 = vsel %vm189, %v763, 0.0
    %767 = vadd.xlane.f32.xlu0 %v766
    %v768 = vpop.xlane.xlu0 %767
    %v769 = vsel %vm189, %v765, 0.0
    %770 = vadd.xlane.f32.xlu0 %v769
    %v771 = vpop.xlane.xlu0 %770
    %v772 = vpack.c.bf16 %v763, %v763
    %v773 = vpack.c.bf16 %v765, %v765
    %774 = vrot.lane.b32.xlu0 %v184, 48
    %v775 = vpop.permute.xlu0 %774
    %v777 = vsel %vm189, %v772, 0
    %v780 = vsel %vm326, %v775, 0
    %782 = vmatprep.subr.bf16.mxu0 0
    %783 = vmatpush1.bf16.msra.mxu0 %v780
    %784 = vmatprep.subr.bf16.mxu0 0
    %785 = vmatpush1.bf16.msra.mxu0 0
    %786 = vmatprep.subr.bf16.mxu0 0
    %787 = vmatpush1.bf16.msra.mxu0 0
    %788 = vmatprep.subr.bf16.mxu0 0
    %789 = vmatpush1.bf16.msra.mxu0 0
    %790 = vmatprep.subr.bf16.mxu0 0
    %791 = vmatpush1.bf16.msra.mxu0 0
    %792 = vmatprep.subr.bf16.mxu0 0
    %793 = vmatpush1.bf16.msra.mxu0 0
    %794 = vmatprep.subr.bf16.mxu0 0
    %795 = vmatpush1.bf16.msra.mxu0 0
    %796 = vmatprep.subr.bf16.mxu0 0
    %797 = vmatpush1.bf16.msra.mxu0 0
    %798 = vmatprep.subr.bf16.mxu0 0
    %799 = vmatpush1.bf16.msra.mxu0 0
    %800 = vmatprep.subr.bf16.mxu0 0
    %801 = vmatpush1.bf16.msra.mxu0 0
    %802 = vmatprep.subr.bf16.mxu0 0
    %803 = vmatpush1.bf16.msra.mxu0 0
    %804 = vmatprep.subr.bf16.mxu0 0
    %805 = vmatpush1.bf16.msra.mxu0 0
    %806 = vmatprep.subr.bf16.mxu0 0
    %807 = vmatpush1.bf16.msra.mxu0 0
    %808 = vmatprep.subr.bf16.mxu0 0
    %809 = vmatpush1.bf16.msra.mxu0 0
    %810 = vmatprep.subr.bf16.mxu0 0
    %811 = vmatpush1.bf16.msra.mxu0 0
    %812 = vmatprep.subr.bf16.mxu0 0
    %813 = vmatpush1.bf16.msra.mxu0 0
    %814 = vmatprep.mubr.bf16.mxu0 0
    %815 = vmatmul.mubr.bf16.gmra.mrb[0].mxu0 %v777
    %v816 = vpop.f32.mrb[0].mxu0
    %v817 = vadd.f32 0.0, %v816
    %v818 = vpop.f32.mrb[0].mxu0
    %v819 = vpop.f32.mrb[0].mxu0
    %v820 = vpop.f32.mrb[0].mxu0
    %821 = vdwg.mxu0
    %822 = vrot.lane.b32.xlu0 %v185, 48
    %v823 = vpop.permute.xlu0 %822
    %v825 = vsel %vm189, %v773, 0
    %v828 = vsel %vm326, %v823, 0
    %830 = vmatprep.subr.bf16.mxu0 0
    %831 = vmatpush1.bf16.msra.mxu0 %v828
    %832 = vmatprep.subr.bf16.mxu0 0
    %833 = vmatpush1.bf16.msra.mxu0 0
    %834 = vmatprep.subr.bf16.mxu0 0
    %835 = vmatpush1.bf16.msra.mxu0 0
    %836 = vmatprep.subr.bf16.mxu0 0
    %837 = vmatpush1.bf16.msra.mxu0 0
    %838 = vmatprep.subr.bf16.mxu0 0
    %839 = vmatpush1.bf16.msra.mxu0 0
    %840 = vmatprep.subr.bf16.mxu0 0
    %841 = vmatpush1.bf16.msra.mxu0 0
    %842 = vmatprep.subr.bf16.mxu0 0
    %843 = vmatpush1.bf16.msra.mxu0 0
    %844 = vmatprep.subr.bf16.mxu0 0
    %845 = vmatpush1.bf16.msra.mxu0 0
    %846 = vmatprep.subr.bf16.mxu0 0
    %847 = vmatpush1.bf16.msra.mxu0 0
    %848 = vmatprep.subr.bf16.mxu0 0
    %849 = vmatpush1.bf16.msra.mxu0 0
    %850 = vmatprep.subr.bf16.mxu0 0
    %851 = vmatpush1.bf16.msra.mxu0 0
    %852 = vmatprep.subr.bf16.mxu0 0
    %853 = vmatpush1.bf16.msra.mxu0 0
    %854 = vmatprep.subr.bf16.mxu0 0
    %855 = vmatpush1.bf16.msra.mxu0 0
    %856 = vmatprep.subr.bf16.mxu0 0
    %857 = vmatpush1.bf16.msra.mxu0 0
    %858 = vmatprep.subr.bf16.mxu0 0
    %859 = vmatpush1.bf16.msra.mxu0 0
    %860 = vmatprep.subr.bf16.mxu0 0
    %861 = vmatpush1.bf16.msra.mxu0 0
    %862 = vmatprep.mubr.bf16.mxu0 0
    %863 = vmatmul.mubr.bf16.gmra.mrb[0].mxu0 %v825
    %v864 = vpop.f32.mrb[0].mxu0
    %v865 = vadd.f32 0.0, %v864
    %v866 = vpop.f32.mrb[0].mxu0
    %v867 = vpop.f32.mrb[0].mxu0
    %v868 = vpop.f32.mrb[0].mxu0
    %869 = vdwg.mxu0
    %v870 = vrcp.pop %v768
    %v871 = vrcp.pop %v771
    %v872 = vmul.f32 %v817, %v870
    %v873 = vmul.f32 %v865, %v871
    %v874 = vpack.c.bf16 %v872, %v872
    %v875 = vpack.c.bf16 %v873, %v873
    %876 = vrot.lane.b32.xlu0 %v184, 104
    %v877 = vpop.permute.xlu0 %876
    %878 = vrot.lane.b32.xlu0 %v184, 72
    %v879 = vpop.permute.xlu0 %878
    %v881 = vsel %vm189, %v877, 0
    %v884 = vsel %vm189, %v879, 0
    %886 = vmatprep.subr.bf16.mxu0 0
    %887 = vmatpush1.bf16.xpose.msra.mxu0 %v884
    %888 = vmatprep.subr.bf16.mxu0 0
    %889 = vmatpush1.bf16.xpose.msra.mxu0 0
    %890 = vmatprep.subr.bf16.mxu0 0
    %891 = vmatpush1.bf16.xpose.msra.mxu0 0
    %892 = vmatprep.subr.bf16.mxu0 0
    %893 = vmatpush1.bf16.xpose.msra.mxu0 0
    %894 = vmatprep.subr.bf16.mxu0 0
    %895 = vmatpush1.bf16.xpose.msra.mxu0 0
    %896 = vmatprep.subr.bf16.mxu0 0
    %897 = vmatpush1.bf16.xpose.msra.mxu0 0
    %898 = vmatprep.subr.bf16.mxu0 0
    %899 = vmatpush1.bf16.xpose.msra.mxu0 0
    %900 = vmatprep.subr.bf16.mxu0 0
    %901 = vmatpush1.bf16.xpose.msra.mxu0 0
    %902 = vmatprep.subr.bf16.mxu0 0
    %903 = vmatpush1.bf16.xpose.msra.mxu0 0
    %904 = vmatprep.subr.bf16.mxu0 0
    %905 = vmatpush1.bf16.xpose.msra.mxu0 0
    %906 = vmatprep.subr.bf16.mxu0 0
    %907 = vmatpush1.bf16.xpose.msra.mxu0 0
    %908 = vmatprep.subr.bf16.mxu0 0
    %909 = vmatpush1.bf16.xpose.msra.mxu0 0
    %910 = vmatprep.subr.bf16.mxu0 0
    %911 = vmatpush1.bf16.xpose.msra.mxu0 0
    %912 = vmatprep.subr.bf16.mxu0 0
    %913 = vmatpush1.bf16.xpose.msra.mxu0 0
    %914 = vmatprep.subr.bf16.mxu0 0
    %915 = vmatpush1.bf16.xpose.msra.mxu0 0
    %916 = vmatprep.subr.bf16.mxu0 0
    %917 = vmatpush1.bf16.xpose.msra.mxu0 0
    %918 = vmatprep.mubr.bf16.mxu0 0
    %919 = vmatmul.mubr.bf16.gmra.mrb[0].mxu0 %v881
    %v920 = vpop.f32.mrb[0].mxu0
    %v921 = vadd.f32 0.0, %v920
    %v922 = vpop.f32.mrb[0].mxu0
    %v923 = vpop.f32.mrb[0].mxu0
    %v924 = vpop.f32.mrb[0].mxu0
    %925 = vdwg.mxu0
    %926 = vrot.lane.b32.xlu0 %v185, 104
    %v927 = vpop.permute.xlu0 %926
    %928 = vrot.lane.b32.xlu0 %v185, 72
    %v929 = vpop.permute.xlu0 %928
    %v931 = vsel %vm189, %v927, 0
    %v934 = vsel %vm189, %v929, 0
    %936 = vmatprep.subr.bf16.mxu0 0
    %937 = vmatpush1.bf16.xpose.msra.mxu0 %v934
    %938 = vmatprep.subr.bf16.mxu0 0
    %939 = vmatpush1.bf16.xpose.msra.mxu0 0
    %940 = vmatprep.subr.bf16.mxu0 0
    %941 = vmatpush1.bf16.xpose.msra.mxu0 0
    %942 = vmatprep.subr.bf16.mxu0 0
    %943 = vmatpush1.bf16.xpose.msra.mxu0 0
    %944 = vmatprep.subr.bf16.mxu0 0
    %945 = vmatpush1.bf16.xpose.msra.mxu0 0
    %946 = vmatprep.subr.bf16.mxu0 0
    %947 = vmatpush1.bf16.xpose.msra.mxu0 0
    %948 = vmatprep.subr.bf16.mxu0 0
    %949 = vmatpush1.bf16.xpose.msra.mxu0 0
    %950 = vmatprep.subr.bf16.mxu0 0
    %951 = vmatpush1.bf16.xpose.msra.mxu0 0
    %952 = vmatprep.subr.bf16.mxu0 0
    %953 = vmatpush1.bf16.xpose.msra.mxu0 0
    %954 = vmatprep.subr.bf16.mxu0 0
    %955 = vmatpush1.bf16.xpose.msra.mxu0 0
    %956 = vmatprep.subr.bf16.mxu0 0
    %957 = vmatpush1.bf16.xpose.msra.mxu0 0
    %958 = vmatprep.subr.bf16.mxu0 0
    %959 = vmatpush1.bf16.xpose.msra.mxu0 0
    %960 = vmatprep.subr.bf16.mxu0 0
    %961 = vmatpush1.bf16.xpose.msra.mxu0 0
    %962 = vmatprep.subr.bf16.mxu0 0
    %963 = vmatpush1.bf16.xpose.msra.mxu0 0
    %964 = vmatprep.subr.bf16.mxu0 0
    %965 = vmatpush1.bf16.xpose.msra.mxu0 0
    %966 = vmatprep.subr.bf16.mxu0 0
    %967 = vmatpush1.bf16.xpose.msra.mxu0 0
    %968 = vmatprep.mubr.bf16.mxu0 0
    %969 = vmatmul.mubr.bf16.gmra.mrb[0].mxu0 %v931
    %v970 = vpop.f32.mrb[0].mxu0
    %v971 = vadd.f32 0.0, %v970
    %v972 = vpop.f32.mrb[0].mxu0
    %v973 = vpop.f32.mrb[0].mxu0
    %v974 = vpop.f32.mrb[0].mxu0
    %975 = vdwg.mxu0
    %v976 = vmul.f32 %v921, 0.35355338
    %v977 = vmul.f32 %v971, 0.35355338
    %v978 = vadd.f32 %v976, %v292
    %v979 = vadd.f32 %v977, %v296
    %v980 = vsel %vm189, %v978, -inf
    %981 = vmax.xlane.f32.xlu0 %v980
    %v982 = vpop.xlane.xlu0 %981
    %v983 = vsel %vm189, %v979, -inf
    %984 = vmax.xlane.f32.xlu0 %v983
    %v985 = vpop.xlane.xlu0 %984
    %v986 = vsub.f32 %v978, %v982
    %v987 = vsub.f32 %v979, %v985
    %v988 = vmul.f32 %v986, 1.442695
    %v989 = vpow.pop %v988
    %v990 = vmul.f32 %v987, 1.442695
    %v991 = vpow.pop %v990
    %v992 = vsel %vm189, %v989, 0.0
    %993 = vadd.xlane.f32.xlu0 %v992
    %v994 = vpop.xlane.xlu0 %993
    %v995 = vsel %vm189, %v991, 0.0
    %996 = vadd.xlane.f32.xlu0 %v995
    %v997 = vpop.xlane.xlu0 %996
    %v998 = vpack.c.bf16 %v989, %v989
    %v999 = vpack.c.bf16 %v991, %v991
    %1000 = vrot.lane.b32.xlu0 %v184, 40
    %v1001 = vpop.permute.xlu0 %1000
    %v1003 = vsel %vm189, %v998, 0
    %v1006 = vsel %vm326, %v1001, 0
    %1008 = vmatprep.subr.bf16.mxu0 0
    %1009 = vmatpush1.bf16.msra.mxu0 %v1006
    %1010 = vmatprep.subr.bf16.mxu0 0
    %1011 = vmatpush1.bf16.msra.mxu0 0
    %1012 = vmatprep.subr.bf16.mxu0 0
    %1013 = vmatpush1.bf16.msra.mxu0 0
    %1014 = vmatprep.subr.bf16.mxu0 0
    %1015 = vmatpush1.bf16.msra.mxu0 0
    %1016 = vmatprep.subr.bf16.mxu0 0
    %1017 = vmatpush1.bf16.msra.mxu0 0
    %1018 = vmatprep.subr.bf16.mxu0 0
    %1019 = vmatpush1.bf16.msra.mxu0 0
    %1020 = vmatprep.subr.bf16.mxu0 0
    %1021 = vmatpush1.bf16.msra.mxu0 0
    %1022 = vmatprep.subr.bf16.mxu0 0
    %1023 = vmatpush1.bf16.msra.mxu0 0
    %1024 = vmatprep.subr.bf16.mxu0 0
    %1025 = vmatpush1.bf16.msra.mxu0 0
    %1026 = vmatprep.subr.bf16.mxu0 0
    %1027 = vmatpush1.bf16.msra.mxu0 0
    %1028 = vmatprep.subr.bf16.mxu0 0
    %1029 = vmatpush1.bf16.msra.mxu0 0
    %1030 = vmatprep.subr.bf16.mxu0 0
    %1031 = vmatpush1.bf16.msra.mxu0 0
    %1032 = vmatprep.subr.bf16.mxu0 0
    %1033 = vmatpush1.bf16.msra.mxu0 0
    %1034 = vmatprep.subr.bf16.mxu0 0
    %1035 = vmatpush1.bf16.msra.mxu0 0
    %1036 = vmatprep.subr.bf16.mxu0 0
    %1037 = vmatpush1.bf16.msra.mxu0 0
    %1038 = vmatprep.subr.bf16.mxu0 0
    %1039 = vmatpush1.bf16.msra.mxu0 0
    %1040 = vmatprep.mubr.bf16.mxu0 0
    %1041 = vmatmul.mubr.bf16.gmra.mrb[0].mxu0 %v1003
    %v1042 = vpop.f32.mrb[0].mxu0
    %v1043 = vadd.f32 0.0, %v1042
    %v1044 = vpop.f32.mrb[0].mxu0
    %v1045 = vpop.f32.mrb[0].mxu0
    %v1046 = vpop.f32.mrb[0].mxu0
    %1047 = vdwg.mxu0
    %1048 = vrot.lane.b32.xlu0 %v185, 40
    %v1049 = vpop.permute.xlu0 %1048
    %v1051 = vsel %vm189, %v999, 0
    %v1054 = vsel %vm326, %v1049, 0
    %1056 = vmatprep.subr.bf16.mxu0 0
    %1057 = vmatpush1.bf16.msra.mxu0 %v1054
    %1058 = vmatprep.subr.bf16.mxu0 0
    %1059 = vmatpush1.bf16.msra.mxu0 0
    %1060 = vmatprep.subr.bf16.mxu0 0
    %1061 = vmatpush1.bf16.msra.mxu0 0
    %1062 = vmatprep.subr.bf16.mxu0 0
    %1063 = vmatpush1.bf16.msra.mxu0 0
    %1064 = vmatprep.subr.bf16.mxu0 0
    %1065 = vmatpush1.bf16.msra.mxu0 0
    %1066 = vmatprep.subr.bf16.mxu0 0
    %1067 = vmatpush1.bf16.msra.mxu0 0
    %1068 = vmatprep.subr.bf16.mxu0 0
    %1069 = vmatpush1.bf16.msra.mxu0 0
    %1070 = vmatprep.subr.bf16.mxu0 0
    %1071 = vmatpush1.bf16.msra.mxu0 0
    %1072 = vmatprep.subr.bf16.mxu0 0
    %1073 = vmatpush1.bf16.msra.mxu0 0
    %1074 = vmatprep.subr.bf16.mxu0 0
    %1075 = vmatpush1.bf16.msra.mxu0 0
    %1076 = vmatprep.subr.bf16.mxu0 0
    %1077 = vmatpush1.bf16.msra.mxu0 0
    %1078 = vmatprep.subr.bf16.mxu0 0
    %1079 = vmatpush1.bf16.msra.mxu0 0
    %1080 = vmatprep.subr.bf16.mxu0 0
    %1081 = vmatpush1.bf16.msra.mxu0 0
    %1082 = vmatprep.subr.bf16.mxu0 0
    %1083 = vmatpush1.bf16.msra.mxu0 0
    %1084 = vmatprep.subr.bf16.mxu0 0
    %1085 = vmatpush1.bf16.msra.mxu0 0
    %1086 = vmatprep.subr.bf16.mxu0 0
    %1087 = vmatpush1.bf16.msra.mxu0 0
    %1088 = vmatprep.mubr.bf16.mxu0 0
    %1089 = vmatmul.mubr.bf16.gmra.mrb[0].mxu0 %v1051
    %v1090 = vpop.f32.mrb[0].mxu0
    %v1091 = vadd.f32 0.0, %v1090
    %v1092 = vpop.f32.mrb[0].mxu0
    %v1093 = vpop.f32.mrb[0].mxu0
    %v1094 = vpop.f32.mrb[0].mxu0
    %1095 = vdwg.mxu0
    %v1096 = vrcp.pop %v994
    %v1097 = vrcp.pop %v997
    %v1098 = vmul.f32 %v1043, %v1096
    %v1099 = vmul.f32 %v1091, %v1097
    %v1100 = vpack.c.bf16 %v1098, %v1098
    %v1101 = vpack.c.bf16 %v1099, %v1099
    %1104 = vrot.lane.b32.xlu0 %v648, 8
    %v1105 = vpop.permute.xlu0 %1104
    %1106 = vrot.lane.b32.xlu0 %v649, 8
    %v1107 = vpop.permute.xlu0 %1106
    %1110 = vrot.lane.b32.xlu0 %v874, 16
    %v1111 = vpop.permute.xlu0 %1110
    %1112 = vrot.lane.b32.xlu0 %v875, 16
    %v1113 = vpop.permute.xlu0 %1112
    %1116 = vrot.lane.b32.xlu0 %v1100, 24
    %v1117 = vpop.permute.xlu0 %1116
    %1118 = vrot.lane.b32.xlu0 %v1101, 24
    %v1119 = vpop.permute.xlu0 %1118
    %v1122 = vsel %vm189, %v422, %v1105
    %v1125 = vsel %vm189, %v423, %v1107
    %vm1126 = vcmask 130048
    %v1128 = vsel %vm1126, %v1122, %v1111
    %v1130 = vsel %vm1126, %v1125, %v1113
    %vm1131 = vcmask 195584
    %v1133 = vsel %vm1131, %v1128, %v1117
    %v1135 = vsel %vm1131, %v1130, %v1119
    %v1136 = vld [vmem:[#allocation2] sm:$0xf]
    %v1137 = vld [vmem:[#allocation2 + $0x4] sm:$0xf]
    %v1138 = vld [vmem:[#allocation2 + $0x8] sm:$0xf]
    %v1139 = vld [vmem:[#allocation2 + $0xc] sm:$0xf]
    %v1142 = vunpack.c.l.b16 %v1133
    %v1143 = vunpack.c.l.b16 %v1135
    %v1144 = vpack.c.b16 %v1143, %v1142
    %v1149 = vunpack.c.l.b16 %v1136
    %v1150 = vunpack.c.l.b16 %v1137
    %v1151 = vunpack.c.l.b16 %v1138
    %v1152 = vunpack.c.l.b16 %v1139
    %v1153 = vpack.c.b16 %v1150, %v1149
    %v1154 = vpack.c.b16 %v1152, %v1151
    %v1158 = vsel %vm139, %v1144, 0
    %1160 = vmatprep.subr.bf16.mxu0 0
    %1161 = vmatpush1.bf16.msra.mxu0 %v1153
    %1162 = vmatprep.subr.bf16.mxu0 0
    %1163 = vmatpush1.bf16.msra.mxu0 %v1154
    %1164 = vmatprep.subr.bf16.mxu0 0
    %1165 = vmatpush1.bf16.msra.mxu0 0
    %1166 = vmatprep.subr.bf16.mxu0 0
    %1167 = vmatpush1.bf16.msra.mxu0 0
    %1168 = vmatprep.subr.bf16.mxu0 0
    %1169 = vmatpush1.bf16.msra.mxu0 0
    %1170 = vmatprep.subr.bf16.mxu0 0
    %1171 = vmatpush1.bf16.msra.mxu0 0
    %1172 = vmatprep.subr.bf16.mxu0 0
    %1173 = vmatpush1.bf16.msra.mxu0 0
    %1174 = vmatprep.subr.bf16.mxu0 0
    %1175 = vmatpush1.bf16.msra.mxu0 0
    %1176 = vmatprep.subr.bf16.mxu0 0
    %1177 = vmatpush1.bf16.msra.mxu0 0
    %1178 = vmatprep.subr.bf16.mxu0 0
    %1179 = vmatpush1.bf16.msra.mxu0 0
    %1180 = vmatprep.subr.bf16.mxu0 0
    %1181 = vmatpush1.bf16.msra.mxu0 0
    %1182 = vmatprep.subr.bf16.mxu0 0
    %1183 = vmatpush1.bf16.msra.mxu0 0
    %1184 = vmatprep.subr.bf16.mxu0 0
    %1185 = vmatpush1.bf16.msra.mxu0 0
    %1186 = vmatprep.subr.bf16.mxu0 0
    %1187 = vmatpush1.bf16.msra.mxu0 0
    %1188 = vmatprep.subr.bf16.mxu0 0
    %1189 = vmatpush1.bf16.msra.mxu0 0
    %1190 = vmatprep.subr.bf16.mxu0 0
    %1191 = vmatpush1.bf16.msra.mxu0 0
    %1192 = vmatprep.mubr.bf16.mxu0 0
    %1193 = vmatmul.mubr.bf16.gmra.mrb[0].mxu0 %v1158
    %v1194 = vpop.f32.mrb[0].mxu0
    %v1195 = vadd.f32 0.0, %v1194
    %v1196 = vpop.f32.mrb[0].mxu0
    %v1197 = vpop.f32.mrb[0].mxu0
    %v1198 = vadd.f32 0.0, %v1197
    %v1199 = vpop.f32.mrb[0].mxu0
    %1200 = vdwg.mxu0
    %v1201 = vadd.f32 %v110, %v1195
    %v1202 = vadd.f32 %v111, %v1198
    %v1203 = vld [vmem:[%s4] sm:$0x1]
    %v1204 = vld [vmem:[%s5] sm:$0x1]
    %v1205 = vsel %vm139, %v1201, 0.0
    %1206 = vadd.xlane.f32.xlu0 %v1205
    %v1207 = vpop.xlane.xlu0 %1206
    %v1208 = vsel %vm139, %v1202, 0.0
    %1209 = vadd.xlane.f32.xlu0 %v1208
    %v1210 = vpop.xlane.xlu0 %1209
    %v1211 = vrcp.pop 32.0
    %v1212 = vmul.f32 %v1207, %v1211
    %v1213 = vmul.f32 %v1210, %v1211
    %v1214 = vsub.f32 %v1201, %v1212
    %v1215 = vsub.f32 %v1202, %v1213
    %v1216 = vmul.f32 %v1214, %v1214
    %v1217 = vmul.f32 %v1215, %v1215
    %v1218 = vsel %vm139, %v1216, 0.0
    %1219 = vadd.xlane.f32.xlu0 %v1218
    %v1220 = vpop.xlane.xlu0 %1219
    %v1221 = vsel %vm139, %v1217, 0.0
    %1222 = vadd.xlane.f32.xlu0 %v1221
    %v1223 = vpop.xlane.xlu0 %1222
    %v1224 = vmul.f32 %v1220, %v1211
    %v1225 = vmul.f32 %v1223, %v1211
    %v1226 = vadd.f32 %v1224, 1e-05
    %v1227 = vadd.f32 %v1225, 1e-05
    %v1228 = vrsqrt.pop %v1226
    %v1229 = vrsqrt.pop %v1227
    %v1230 = vmul.f32 %v1214, %v1228
    %v1231 = vmul.f32 %v1215, %v1229
    %v1233 = vlaneseq
    %v1234 = vshrl.u32 %v1233, 7
    %v1235 = vsub.s32 0, %v1234
    %v1236 = vrot.slane %v1203, %v1235
    %v1238 = vmul.f32 %v1230, %v1236
    %v1239 = vmul.f32 %v1231, %v1236
    %v1241 = vlaneseq
    %v1242 = vshrl.u32 %v1241, 7
    %v1243 = vsub.s32 0, %v1242
    %v1244 = vrot.slane %v1204, %v1243
    %v1246 = vadd.f32 %v1238, %v1244
    %v1247 = vadd.f32 %v1239, %v1244
    %v1248 = vpack.c.bf16 %v1247, %v1246
    %v1249 = vld [vmem:[#allocation5] sm:$0xf]
    %v1250 = vld [vmem:[#allocation5 + $0x4] sm:$0xf]
    %v1251 = vld [vmem:[#allocation5 + $0x8] sm:$0xf]
    %v1252 = vld [vmem:[#allocation5 + $0xc] sm:$0xf]
    %v1253 = vld [vmem:[#allocation7] sm:$0x1]
    %v1255 = vlaneseq
    %v1256 = vshrl.u32 %v1255, 7
    %v1257 = vsub.s32 0, %v1256
    %v1258 = vrot.slane %v1253, %v1257
    %v1264 = vunpack.c.l.b16 %v1249
    %v1265 = vunpack.c.l.b16 %v1250
    %v1266 = vunpack.c.l.b16 %v1251
    %v1267 = vunpack.c.l.b16 %v1252
    %v1268 = vpack.c.b16 %v1265, %v1264
    %v1269 = vpack.c.b16 %v1267, %v1266
    %v1273 = vsel %vm139, %v1248, 0
    %1275 = vmatprep.subr.bf16.mxu0 0
    %1276 = vmatpush1.bf16.msra.mxu0 %v1268
    %1277 = vmatprep.subr.bf16.mxu0 0
    %1278 = vmatpush1.bf16.msra.mxu0 %v1269
    %1279 = vmatprep.subr.bf16.mxu0 0
    %1280 = vmatpush1.bf16.msra.mxu0 0
    %1281 = vmatprep.subr.bf16.mxu0 0
    %1282 = vmatpush1.bf16.msra.mxu0 0
    %1283 = vmatprep.subr.bf16.mxu0 0
    %1284 = vmatpush1.bf16.msra.mxu0 0
    %1285 = vmatprep.subr.bf16.mxu0 0
    %1286 = vmatpush1.bf16.msra.mxu0 0
    %1287 = vmatprep.subr.bf16.mxu0 0
    %1288 = vmatpush1.bf16.msra.mxu0 0
    %1289 = vmatprep.subr.bf16.mxu0 0
    %1290 = vmatpush1.bf16.msra.mxu0 0
    %1291 = vmatprep.subr.bf16.mxu0 0
    %1292 = vmatpush1.bf16.msra.mxu0 0
    %1293 = vmatprep.subr.bf16.mxu0 0
    %1294 = vmatpush1.bf16.msra.mxu0 0
    %1295 = vmatprep.subr.bf16.mxu0 0
    %1296 = vmatpush1.bf16.msra.mxu0 0
    %1297 = vmatprep.subr.bf16.mxu0 0
    %1298 = vmatpush1.bf16.msra.mxu0 0
    %1299 = vmatprep.subr.bf16.mxu0 0
    %1300 = vmatpush1.bf16.msra.mxu0 0
    %1301 = vmatprep.subr.bf16.mxu0 0
    %1302 = vmatpush1.bf16.msra.mxu0 0
    %1303 = vmatprep.subr.bf16.mxu0 0
    %1304 = vmatpush1.bf16.msra.mxu0 0
    %1305 = vmatprep.subr.bf16.mxu0 0
    %1306 = vmatpush1.bf16.msra.mxu0 0
    %1307 = vmatprep.mubr.bf16.mxu0 0
    %1308 = vmatmul.mubr.bf16.gmra.mrb[0].mxu0 %v1273
    %v1309 = vpop.f32.mrb[0].mxu0
    %v1310 = vadd.f32 %v1258, %v1309
    %v1311 = vpop.f32.mrb[0].mxu0
    %v1312 = vpop.f32.mrb[0].mxu0
    %v1313 = vadd.f32 %v1258, %v1312
    %v1314 = vpop.f32.mrb[0].mxu0
    %1315 = vdwg.mxu0
    %v1316 = vmax.f32 %v1310, 0.0
    %v1317 = vmax.f32 %v1313, 0.0
    %v1318 = vpack.c.bf16 %v1317, %v1316
    %v1319 = vld [vmem:[%s8] sm:$0xf]
    %v1320 = vld [vmem:[%s8 + $0x4] sm:$0xf]
    %v1321 = vld [vmem:[%s8 + $0x8] sm:$0xf]
    %v1322 = vld [vmem:[%s8 + $0xc] sm:$0xf]
    %v1323 = vld [vmem:[%s8 + $0x10] sm:$0xf]
    %v1324 = vld [vmem:[%s8 + $0x14] sm:$0xf]
    %v1325 = vld [vmem:[%s8 + $0x18] sm:$0xf]
    %v1326 = vld [vmem:[%s8 + $0x1c] sm:$0xf]
    %v1335 = vunpack.c.l.b16 %v1319
    %v1336 = vunpack.c.l.b16 %v1320
    %v1337 = vunpack.c.l.b16 %v1321
    %v1338 = vunpack.c.l.b16 %v1322
    %v1339 = vunpack.c.l.b16 %v1323
    %v1340 = vunpack.c.l.b16 %v1324
    %v1341 = vunpack.c.l.b16 %v1325
    %v1342 = vunpack.c.l.b16 %v1326
    %v1343 = vpack.c.b16 %v1336, %v1335
    %v1344 = vpack.c.b16 %v1338, %v1337
    %v1345 = vpack.c.b16 %v1340, %v1339
    %v1346 = vpack.c.b16 %v1342, %v1341
    %vm1351 = vcmask 523264
    %v1353 = vsel %vm1351, %v1318, 0
    %1355 = vmatprep.subr.bf16.mxu0 0
    %1356 = vmatpush1.bf16.msra.mxu0 %v1343
    %1357 = vmatprep.subr.bf16.mxu0 0
    %1358 = vmatpush1.bf16.msra.mxu0 %v1344
    %1359 = vmatprep.subr.bf16.mxu0 0
    %1360 = vmatpush1.bf16.msra.mxu0 %v1345
    %1361 = vmatprep.subr.bf16.mxu0 0
    %1362 = vmatpush1.bf16.msra.mxu0 %v1346
    %1363 = vmatprep.subr.bf16.mxu0 0
    %1364 = vmatpush1.bf16.msra.mxu0 0
    %1365 = vmatprep.subr.bf16.mxu0 0
    %1366 = vmatpush1.bf16.msra.mxu0 0
    %1367 = vmatprep.subr.bf16.mxu0 0
    %1368 = vmatpush1.bf16.msra.mxu0 0
    %1369 = vmatprep.subr.bf16.mxu0 0
    %1370 = vmatpush1.bf16.msra.mxu0 0
    %1371 = vmatprep.subr.bf16.mxu0 0
    %1372 = vmatpush1.bf16.msra.mxu0 0
    %1373 = vmatprep.subr.bf16.mxu0 0
    %1374 = vmatpush1.bf16.msra.mxu0 0
    %1375 = vmatprep.subr.bf16.mxu0 0
    %1376 = vmatpush1.bf16.msra.mxu0 0
    %1377 = vmatprep.subr.bf16.mxu0 0
    %1378 = vmatpush1.bf16.msra.mxu0 0
    %1379 = vmatprep.subr.bf16.mxu0 0
    %1380 = vmatpush1.bf16.msra.mxu0 0
    %1381 = vmatprep.subr.bf16.mxu0 0
    %1382 = vmatpush1.bf16.msra.mxu0 0
    %1383 = vmatprep.subr.bf16.mxu0 0
    %1384 = vmatpush1.bf16.msra.mxu0 0
    %1385 = vmatprep.subr.bf16.mxu0 0
    %1386 = vmatpush1.bf16.msra.mxu0 0
    %1387 = vmatprep.mubr.bf16.mxu0 0
    %1388 = vmatmul.mubr.bf16.gmra.mrb[0].mxu0 %v1353
    %v1389 = vpop.f32.mrb[0].mxu0
    %v1390 = vadd.f32 0.0, %v1389
    %v1391 = vpop.f32.mrb[0].mxu0
    %v1392 = vpop.f32.mrb[0].mxu0
    %v1393 = vadd.f32 0.0, %v1392
    %v1394 = vpop.f32.mrb[0].mxu0
    %1395 = vdwg.mxu0
    %v1396 = vadd.f32 %v1246, %v1390
    %v1397 = vadd.f32 %v1247, %v1393
    %v1398 = vld [vmem:[%s9] sm:$0x1]
    %v1400 = vlaneseq
    %v1401 = vshrl.u32 %v1400, 7
    %v1402 = vsub.s32 0, %v1401
    %v1403 = vrot.slane %v1398, %v1402
    %v1405 = vadd.f32 %v1396, %v1403
    %v1406 = vadd.f32 %v1397, %v1403
    %v1407 = vld [vmem:[%s10] sm:$0x1]
    %v1408 = vld [vmem:[%s11] sm:$0x1]
    %v1409 = vsel %vm139, %v1405, 0.0
    %1410 = vadd.xlane.f32.xlu0 %v1409
    %v1411 = vpop.xlane.xlu0 %1410
    %v1412 = vsel %vm139, %v1406, 0.0
    %1413 = vadd.xlane.f32.xlu0 %v1412
    %v1414 = vpop.xlane.xlu0 %1413
    %v1415 = vmul.f32 %v1411, %v1211
    %v1416 = vmul.f32 %v1414, %v1211
    %v1417 = vsub.f32 %v1405, %v1415
    %v1418 = vsub.f32 %v1406, %v1416
    %v1419 = vmul.f32 %v1417, %v1417
    %v1420 = vmul.f32 %v1418, %v1418
    %v1421 = vsel %vm139, %v1419, 0.0
    %1422 = vadd.xlane.f32.xlu0 %v1421
    %v1423 = vpop.xlane.xlu0 %1422
    %v1424 = vsel %vm139, %v1420, 0.0
    %1425 = vadd.xlane.f32.xlu0 %v1424
    %v1426 = vpop.xlane.xlu0 %1425
    %v1427 = vmul.f32 %v1423, %v1211
    %v1428 = vmul.f32 %v1426, %v1211
    %v1429 = vadd.f32 %v1427, 1e-05
    %v1430 = vadd.f32 %v1428, 1e-05
    %v1431 = vrsqrt.pop %v1429
    %v1432 = vrsqrt.pop %v1430
    %v1433 = vmul.f32 %v1417, %v1431
    %v1434 = vmul.f32 %v1418, %v1432
    %v1436 = vlaneseq
    %v1437 = vshrl.u32 %v1436, 7
    %v1438 = vsub.s32 0, %v1437
    %v1439 = vrot.slane %v1407, %v1438
    %v1441 = vmul.f32 %v1433, %v1439
    %v1442 = vmul.f32 %v1434, %v1439
    %v1444 = vlaneseq
    %v1445 = vshrl.u32 %v1444, 7
    %v1446 = vsub.s32 0, %v1445
    %v1447 = vrot.slane %v1408, %v1446
    %v1449 = vadd.f32 %v1441, %v1447
    %v1450 = vadd.f32 %v1442, %v1447
    %v1451 = vpack.c.bf16 %v1449, %v1449
    %v1452 = vpack.c.bf16 %v1450, %v1450
    %v1453 = vld [vmem:[%s12] sm:$0xff]
    %v1454 = vld [vmem:[%s12 + $0x8] sm:$0xff]
    %v1455 = vld [vmem:[%s12 + $0x10] sm:$0xff]
    %v1456 = vld [vmem:[%s12 + $0x18] sm:$0xff]
    %v1457 = vld [vmem:[%s13] sm:$0x3]
    %v1459 = vlaneseq
    %v1460 = vshrl.u32 %v1459, 7
    %v1461 = vsub.s32 0, %v1460
    %v1462 = vrot.slane %v1457, %v1461
    %v1463 = vlaneseq
    %v1464 = vshrl.u32 %v1463, 7
    %v1465 = vsub.s32 1, %v1464
    %v1466 = vrot.slane %v1457, %v1465
    %v1471 = vunpack.c.l.b16 %v1451
    %v1472 = vunpack.c.l.b16 %v1452
    %v1473 = vrot.slane %v1472, 7
    %vm1474 = vcmask 1041409
    %v1475 = vsel %vm1474, %v1473, %v1471
    %v1476 = vpack.c.b16 %v1475, %v1475
    %v1481 = vunpack.c.l.b16 %v1453
    %v1482 = vunpack.c.h.b16 %v1453
    %v1483 = vunpack.c.l.b16 %v1454
    %v1484 = vunpack.c.h.b16 %v1454
    %v1485 = vunpack.c.l.b16 %v1455
    %v1486 = vunpack.c.h.b16 %v1455
    %v1487 = vunpack.c.l.b16 %v1456
    %v1488 = vunpack.c.h.b16 %v1456
    %v1489 = vpack.c.b16 %v1483, %v1481
    %v1490 = vpack.c.b16 %v1484, %v1482
    %v1491 = vpack.c.b16 %v1487, %v1485
    %v1492 = vpack.c.b16 %v1488, %v1486
    %v1498 = vsel %vm139, %v1476, 0
    %1500 = vmatprep.subr.bf16.mxu0 %v1490
    %1501 = vmatpush1.bf16.msra.mxu0 %v1489
    %1502 = vmatprep.subr.bf16.mxu0 %v1492
    %1503 = vmatpush1.bf16.msra.mxu0 %v1491
    %1504 = vmatprep.subr.bf16.mxu0 0
    %1505 = vmatpush1.bf16.msra.mxu0 0
    %1506 = vmatprep.subr.bf16.mxu0 0
    %1507 = vmatpush1.bf16.msra.mxu0 0
    %1508 = vmatprep.subr.bf16.mxu0 0
    %1509 = vmatpush1.bf16.msra.mxu0 0
    %1510 = vmatprep.subr.bf16.mxu0 0
    %1511 = vmatpush1.bf16.msra.mxu0 0
    %1512 = vmatprep.subr.bf16.mxu0 0
    %1513 = vmatpush1.bf16.msra.mxu0 0
    %1514 = vmatprep.subr.bf16.mxu0 0
    %1515 = vmatpush1.bf16.msra.mxu0 0
    %1516 = vmatprep.subr.bf16.mxu0 0
    %1517 = vmatpush1.bf16.msra.mxu0 0
    %1518 = vmatprep.subr.bf16.mxu0 0
    %1519 = vmatpush1.bf16.msra.mxu0 0
    %1520 = vmatprep.subr.bf16.mxu0 0
    %1521 = vmatpush1.bf16.msra.mxu0 0
    %1522 = vmatprep.subr.bf16.mxu0 0
    %1523 = vmatpush1.bf16.msra.mxu0 0
    %1524 = vmatprep.subr.bf16.mxu0 0
    %1525 = vmatpush1.bf16.msra.mxu0 0
    %1526 = vmatprep.subr.bf16.mxu0 0
    %1527 = vmatpush1.bf16.msra.mxu0 0
    %1528 = vmatprep.subr.bf16.mxu0 0
    %1529 = vmatpush1.bf16.msra.mxu0 0
    %1530 = vmatprep.subr.bf16.mxu0 0
    %1531 = vmatpush1.bf16.msra.mxu0 0
    %1532 = vmatprep.mubr.bf16.mxu0 0
    %1533 = vmatmul.mubr.bf16.gmra.mrb[0].mxu0 %v1498
    %v1534 = vpop.f32.mrb[0].mxu0
    %v1535 = vadd.f32 %v1462, %v1534
    %v1536 = vpop.f32.mrb[0].mxu0
    %v1537 = vadd.f32 %v1466, %v1536
    %v1538 = vpop.f32.mrb[0].mxu0
    %v1539 = vpop.f32.mrb[0].mxu0
    %1540 = vdwg.mxu0
    %v1541 = vmax.f32 %v1535, 0.0
    %v1542 = vmax.f32 %v1537, 0.0
    %v1543 = vpack.c.bf16 %v1541, %v1541
    %v1544 = vpack.c.bf16 %v1542, %v1542
    %v1545 = vld [vmem:[#allocation8] sm:$0xf]
    %v1546 = vld [vmem:[#allocation8 + $0x4] sm:$0xf]
    %v1547 = vld [vmem:[#allocation8 + $0x8] sm:$0xf]
    %v1548 = vld [vmem:[#allocation8 + $0xc] sm:$0xf]
    %v1549 = vld [vmem:[#allocation8 + $0x10] sm:$0xf]
    %v1550 = vld [vmem:[#allocation8 + $0x14] sm:$0xf]
    %v1551 = vld [vmem:[#allocation8 + $0x18] sm:$0xf]
    %v1552 = vld [vmem:[#allocation8 + $0x1c] sm:$0xf]
    %v1553 = vld [vmem:[#allocation8 + $0x20] sm:$0xf]
    %v1554 = vld [vmem:[#allocation8 + $0x24] sm:$0xf]
    %v1555 = vld [vmem:[#allocation8 + $0x28] sm:$0xf]
    %v1556 = vld [vmem:[#allocation8 + $0x2c] sm:$0xf]
    %v1557 = vld [vmem:[#allocation8 + $0x30] sm:$0xf]
    %v1558 = vld [vmem:[#allocation8 + $0x34] sm:$0xf]
    %v1559 = vld [vmem:[#allocation8 + $0x38] sm:$0xf]
    %v1560 = vld [vmem:[#allocation8 + $0x3c] sm:$0xf]
    %v1561 = vld [vmem:[#allocation8 + $0x40] sm:$0xf]
    %v1562 = vld [vmem:[#allocation8 + $0x44] sm:$0xf]
    %v1563 = vld [vmem:[#allocation8 + $0x48] sm:$0xf]
    %v1564 = vld [vmem:[#allocation8 + $0x4c] sm:$0xf]
    %v1565 = vld [vmem:[#allocation8 + $0x50] sm:$0xf]
    %v1566 = vld [vmem:[#allocation8 + $0x54] sm:$0xf]
    %v1567 = vld [vmem:[#allocation8 + $0x58] sm:$0xf]
    %v1568 = vld [vmem:[#allocation8 + $0x5c] sm:$0xf]
    %v1569 = vld [vmem:[#allocation8 + $0x60] sm:$0xf]
    %v1570 = vld [vmem:[#allocation8 + $0x64] sm:$0xf]
    %v1571 = vld [vmem:[#allocation8 + $0x68] sm:$0xf]
    %v1572 = vld [vmem:[#allocation8 + $0x6c] sm:$0xf]
    %v1573 = vld [vmem:[#allocation8 + $0x70] sm:$0xf]
    %v1574 = vld [vmem:[#allocation8 + $0x74] sm:$0xf]
    %v1575 = vld [vmem:[#allocation8 + $0x78] sm:$0xf]
    %v1576 = vld [vmem:[#allocation8 + $0x7c] sm:$0xf]
    %v1577 = vld [vmem:[%s15] sm:$0x1]
    %v1579 = vlaneseq
    %v1580 = vshrl.u32 %v1579, 7
    %v1581 = vsub.s32 0, %v1580
    %v1582 = vrot.slane %v1577, %v1581
    %v1616 = vunpack.c.l.b16 %v1545
    %v1617 = vunpack.c.l.b16 %v1546
    %v1618 = vunpack.c.l.b16 %v1547
    %v1619 = vunpack.c.l.b16 %v1548
    %v1620 = vunpack.c.l.b16 %v1549
    %v1621 = vunpack.c.l.b16 %v1550
    %v1622 = vunpack.c.l.b16 %v1551
    %v1623 = vunpack.c.l.b16 %v1552
    %v1624 = vunpack.c.l.b16 %v1553
    %v1625 = vunpack.c.l.b16 %v1554
    %v1626 = vunpack.c.l.b16 %v1555
    %v1627 = vunpack.c.l.b16 %v1556
    %v1628 = vunpack.c.l.b16 %v1557
    %v1629 = vunpack.c.l.b16 %v1558
    %v1630 = vunpack.c.l.b16 %v1559
    %v1631 = vunpack.c.l.b16 %v1560
    %v1632 = vunpack.c.l.b16 %v1561
    %v1633 = vunpack.c.l.b16 %v1562
    %v1634 = vunpack.c.l.b16 %v1563
    %v1635 = vunpack.c.l.b16 %v1564
    %v1636 = vunpack.c.l.b16 %v1565
    %v1637 = vunpack.c.l.b16 %v1566
    %v1638 = vunpack.c.l.b16 %v1567
    %v1639 = vunpack.c.l.b16 %v1568
    %v1640 = vunpack.c.l.b16 %v1569
    %v1641 = vunpack.c.l.b16 %v1570
    %v1642 = vunpack.c.l.b16 %v1571
    %v1643 = vunpack.c.l.b16 %v1572
    %v1644 = vunpack.c.l.b16 %v1573
    %v1645 = vunpack.c.l.b16 %v1574
    %v1646 = vunpack.c.l.b16 %v1575
    %v1647 = vunpack.c.l.b16 %v1576
    %v1648 = vpack.c.b16 %v1617, %v1616
    %v1649 = vpack.c.b16 %v1619, %v1618
    %v1650 = vpack.c.b16 %v1621, %v1620
    %v1651 = vpack.c.b16 %v1623, %v1622
    %v1652 = vpack.c.b16 %v1625, %v1624
    %v1653 = vpack.c.b16 %v1627, %v1626
    %v1654 = vpack.c.b16 %v1629, %v1628
    %v1655 = vpack.c.b16 %v1631, %v1630
    %v1656 = vpack.c.b16 %v1633, %v1632
    %v1657 = vpack.c.b16 %v1635, %v1634
    %v1658 = vpack.c.b16 %v1637, %v1636
    %v1659 = vpack.c.b16 %v1639, %v1638
    %v1660 = vpack.c.b16 %v1641, %v1640
    %v1661 = vpack.c.b16 %v1643, %v1642
    %v1662 = vpack.c.b16 %v1645, %v1644
    %v1663 = vpack.c.b16 %v1647, %v1646
    %1680 = vmatprep.subr.bf16.mxu0 0
    %1681 = vmatpush1.bf16.msra.mxu0 %v1648
    %1682 = vmatprep.subr.bf16.mxu0 0
    %1683 = vmatpush1.bf16.msra.mxu0 %v1649
    %1684 = vmatprep.subr.bf16.mxu0 0
    %1685 = vmatpush1.bf16.msra.mxu0 %v1650
    %1686 = vmatprep.subr.bf16.mxu0 0
    %1687 = vmatpush1.bf16.msra.mxu0 %v1651
    %1688 = vmatprep.subr.bf16.mxu0 0
    %1689 = vmatpush1.bf16.msra.mxu0 %v1652
    %1690 = vmatprep.subr.bf16.mxu0 0
    %1691 = vmatpush1.bf16.msra.mxu0 %v1653
    %1692 = vmatprep.subr.bf16.mxu0 0
    %1693 = vmatpush1.bf16.msra.mxu0 %v1654
    %1694 = vmatprep.subr.bf16.mxu0 0
    %1695 = vmatpush1.bf16.msra.mxu0 %v1655
    %1696 = vmatprep.subr.bf16.mxu0 0
    %1697 = vmatpush1.bf16.msra.mxu0 %v1656
    %1698 = vmatprep.subr.bf16.mxu0 0
    %1699 = vmatpush1.bf16.msra.mxu0 %v1657
    %1700 = vmatprep.subr.bf16.mxu0 0
    %1701 = vmatpush1.bf16.msra.mxu0 %v1658
    %1702 = vmatprep.subr.bf16.mxu0 0
    %1703 = vmatpush1.bf16.msra.mxu0 %v1659
    %1704 = vmatprep.subr.bf16.mxu0 0
    %1705 = vmatpush1.bf16.msra.mxu0 %v1660
    %1706 = vmatprep.subr.bf16.mxu0 0
    %1707 = vmatpush1.bf16.msra.mxu0 %v1661
    %1708 = vmatprep.subr.bf16.mxu0 0
    %1709 = vmatpush1.bf16.msra.mxu0 %v1662
    %1710 = vmatprep.subr.bf16.mxu0 0
    %1711 = vmatpush1.bf16.msra.mxu0 %v1663
    %1712 = vmatprep.mubr.bf16.mxu0 %v1544
    %1713 = vmatmul.mubr.bf16.gmra.mrb[0].mxu0 %v1543
    %v1714 = vpop.f32.mrb[0].mxu0
    %v1715 = vadd.f32 %v1582, %v1714
    %v1716 = vpop.f32.mrb[0].mxu0
    %v1717 = vpop.f32.mrb[0].mxu0
    %v1718 = vpop.f32.mrb[0].mxu0
    %1719 = vdwg.mxu0
    %1720 = vst [vmem:[#allocation10] sm:$0x3] %v1715
    // Predicated region
    $region82: #{tpu_custom_call.1} parent=1 // pred_check
      _
    $region83: #{tpu_custom_call.1} parent=1 // pred_check_branch
      %1722 = sbr.rel (0) target = $region85
    $region84: #{tpu_custom_call.1} parent=1 // pred_region
      %s1724 = ssub.s32 32, 32
      %1725 = vsyncadd [#allocation4], %s1724
      %s1727 = sshll.u32 [#allocation10], 4
      %s1728 = int_to_ptr.vmem [resolvable:$true] %s1727
      %1730 = dma.vmem_to_hbm [thread:$0]  %s1728, 32, %s16, [#allocation4]
    $region85: #{tpu_custom_call.1} parent=1 // pred_fallthru
      _
    // Predicated region
    $region86: #{tpu_custom_call.1} parent=1 // pred_check
      _
    $region87: #{tpu_custom_call.1} parent=1 // pred_check_branch
      %1732 = sbr.rel (0) target = $region89
    $region88: #{tpu_custom_call.1} parent=1 // pred_region
      %1733 = dma.done [#allocation4], 32
    $region89: #{tpu_custom_call.1} parent=1 // pred_fallthru
      _
    %1734 = vsyncpa [#allocation3], 1
    %1735 = vsyncpa [#allocation6], 1
    %1736 = vsyncpa [#allocation9], 1
    %1737 = vsyncpa [#allocation4], 1

</llo_original>
